<compile_context>
chip_gen: v7x
topology: tpu7x:2x2x1
jax: 0.10.0
libtpu: 0.0.40
codegen_flags: <defaults>
</compile_context>

<pallas_src>
import jax
import jax.numpy as jnp
from jax.experimental import pallas as pl
from jax.experimental.pallas import tpu as pltpu

HIDDEN = 32     # hidden_size
BATCH = 2       # batch_size
EMBED = 32      # embed_size
DICT = 50       # dict_size
SEQLEN = 8      # maxlength
BN_EPS = 1e-5


def bidir_lstm_encoder_kernel(
        x2_ref,                                  # (T*B, 2E)  bf16, rows = [x(t) | x(T-1-t)]
        wih0_ref, whh0_ref, b0_ref,              # (2E,8H) bf16, (2H,8H) bf16, (1,8H) f32
        a1_ref, b1w_ref, whh1_ref, b1_ref,       # (2H,8H) bf16 x3, (1,8H) f32
        wra_ref, wrb_ref, br_ref,                # (2H,H) bf16 x2, (1,H) f32
        gscale_ref, goff_ref,                    # (1,8H) f32 x2  (gate-activation fixup)
        bn_scale_ref, bn_shift_ref,              # (1,H) f32 x2
        out_ref,                                 # (B, H) f32
        xg_ref,                                  # (T*B, 8H) f32 scratch: per-step gate inputs
        hfA_ref, hfB_ref):                       # (T*B, 2H) f32 scratch: layer-0 states
    H = HIDDEN
    T = SEQLEN
    B = BATCH
    H2, H4, H6, H8 = 2 * H, 4 * H, 6 * H, 8 * H

    # Hoisted once; reused by every unrolled step (no per-step rematerialization).
    gscale = gscale_ref[...]
    goff = goff_ref[...]

    def run_layer(whh_bf16, store_fn):
        """Fused fwd+rev recurrence over the pre-computed gate-input slab in xg_ref."""
        h_bf = jnp.zeros((B, H2), jnp.bfloat16)
        c = jnp.zeros((B, H2), jnp.float32)
        h_first_bf = None
        for s in range(T):                       # T is small & static -> unrolled
            xg = xg_ref[pl.ds(s * B, B), :]
            # TODO(synk): a weight-stationary W_hh (pltpu.matmul_push_rhs /
            # matmul_acc_lhs / matmul_pop) would drop the per-step RHS re-stream;
            # kept jnp.dot for portable, guaranteed lowering.
            gates = xg + jnp.dot(h_bf, whh_bf16,
                                 preferred_element_type=jnp.float32)
            sg = jax.nn.sigmoid(gates)           # one full-width EUP pass
            act = sg * gscale + goff             # g columns -> 2*sig-1 == tanh (pre-scaled)
            # gate layout: [i | f | g | o], each 2H wide ([fwd|rev] interleaved per gate)
            c = act[:, H2:H4] * c + act[:, 0:H2] * act[:, H4:H6]
            h = act[:, H6:H8] * jnp.tanh(c)      # [h_f | h_r], f32
            h_bf = h.astype(jnp.bfloat16)
            if store_fn is not None:
                store_fn(s, h)
            if s == 0:
                h_first_bf = h_bf
        return h_first_bf, h_bf

    # ---- layer 0: ALL input projections in one slab matmul, already step-ordered ----
    # row block s of xg_ref = fwd-gate cols from W_ih0_f @ x(s), rev cols from W_ih0_r @ x(T-1-s)
    xg_ref[...] = (jnp.dot(x2_ref[...], wih0_ref[...],
                           preferred_element_type=jnp.float32) + b0_ref[...])

    def store0(s, h):
        # hfA row s        = [f0(s)     | r0(T-1-s)]
        # hfB row (T-1-s)  = [f0(s)     | r0(T-1-s)]  ->  hfB row u = [f0(T-1-u) | r0(u)]
        hfA_ref[pl.ds(s * B, B), :] = h
        hfB_ref[pl.ds((T - 1 - s) * B, B), :] = h

    run_layer(whh0_ref[...], store0)
    # TODO(synk): nn.LSTM dropout=0.2 between layers is training-only RNG; eval
    # semantics (identity) implemented here.

    # ---- layer 1 input projections: two slab matmuls on the stored state slabs ----
    # a1 keeps (top rows -> fwd cols, bottom rows -> rev cols) of the fused W_ih1;
    # b1w keeps the complementary blocks.  Summing gives the exact fused x-projection
    # for step s with no reversed slicing and no lane-axis concatenation.
    xg_ref[...] = (
        jnp.dot(hfA_ref[...].astype(jnp.bfloat16), a1_ref[...],
                preferred_element_type=jnp.float32)
        + jnp.dot(hfB_ref[...].astype(jnp.bfloat16), b1w_ref[...],
                  preferred_element_type=jnp.float32)
        + b1_ref[...])

    h1_first_bf, h1_last_bf = run_layer(whh1_ref[...], None)

    # ---- out[:, -1, :] = [f1(T-1) || r1(T-1)] -> reform Linear(2H -> H) ----
    # h1_last holds f1(T-1) in its fwd half; h1_first holds r1(T-1) in its rev half.
    # wra / wrb are zero-padded in the wrapper so no lane concat / slice is needed.
    y = (jnp.dot(h1_last_bf, wra_ref[...], preferred_element_type=jnp.float32)
         + jnp.dot(h1_first_bf, wrb_ref[...], preferred_element_type=jnp.float32)
         + br_ref[...])                                                  # (B, H)

    # Dropout(0.5): identity in eval mode.
    y = y * jax.nn.sigmoid(y)                    # Swish
    y = y * bn_scale_ref[...] + bn_shift_ref[...]  # BatchNorm1d (eval, folded)

    out_ref[...] = y


# ------------------------- parameter construction -------------------------

def init_params(key):
    """Deterministic synthetic parameters with PyTorch-default shapes."""
    H, E = HIDDEN, EMBED
    ks = jax.random.split(key, 24)
    bound = 1.0 / float(jnp.sqrt(jnp.float32(H)))

    def u(k, shape):
        return jax.random.uniform(k, shape, jnp.float32, -bound, bound)

    p = {}
    p["embed"] = jax.random.normal(ks[0], (DICT, E), jnp.float32)        # nn.Embedding
    idx = 1
    for layer, din in ((0, E), (1, 2 * H)):                              # layer1 din = 2H (bidir)
        for d in ("f", "r"):
            p[f"wih{layer}{d}"] = u(ks[idx], (4 * H, din)); idx += 1
            p[f"whh{layer}{d}"] = u(ks[idx], (4 * H, H)); idx += 1
            p[f"bih{layer}{d}"] = u(ks[idx], (4 * H,)); idx += 1
            p[f"bhh{layer}{d}"] = u(ks[idx], (4 * H,)); idx += 1
    bound_r = 1.0 / float(jnp.sqrt(jnp.float32(2 * H)))
    p["w_reform"] = jax.random.uniform(ks[idx], (H, 2 * H), jnp.float32, -bound_r, bound_r); idx += 1
    p["b_reform"] = jax.random.uniform(ks[idx], (H,), jnp.float32, -bound_r, bound_r); idx += 1
    # BatchNorm1d defaults: weight=1, bias=0, running_mean=0, running_var=1
    p["bn_gamma"] = jnp.ones((H,), jnp.float32)
    p["bn_beta"] = jnp.zeros((H,), jnp.float32)
    p["bn_rmean"] = jnp.zeros((H,), jnp.float32)
    p["bn_rvar"] = jnp.ones((H,), jnp.float32)
    return p


def _fuse_ih(w_f, w_r):
    """(4H, Din) fwd/rev PyTorch W_ih -> (Din, 8H) fused, gate-interleaved columns
    [i_f,i_r,f_f,f_r,2*g_f,2*g_r,o_f,o_r] (g columns pre-scaled for the tanh trick)."""
    H = w_f.shape[0] // 4
    cols = []
    for g in range(4):
        scale = 2.0 if g == 2 else 1.0
        cols.append(w_f[g * H:(g + 1) * H, :].T * scale)
        cols.append(w_r[g * H:(g + 1) * H, :].T * scale)
    return jnp.concatenate(cols, axis=1)


def _fuse_blockdiag(w_f, w_r):
    """(4H, Din) fwd/rev weights -> block-structured (2*Din, 8H): the first Din rows
    feed ONLY the fwd gate columns (via w_f), the last Din rows ONLY the rev gate
    columns (via w_r); same gate-interleaved column order as _fuse_ih."""
    H = w_f.shape[0] // 4
    din = w_f.shape[1]
    Z = jnp.zeros((din, H), jnp.float32)
    cols = []
    for g in range(4):
        scale = 2.0 if g == 2 else 1.0
        wf = w_f[g * H:(g + 1) * H, :].T * scale
        wr = w_r[g * H:(g + 1) * H, :].T * scale
        cols.append(jnp.concatenate([wf, Z], axis=0))
        cols.append(jnp.concatenate([Z, wr], axis=0))
    return jnp.concatenate(cols, axis=1)


def _fuse_bias(bih_f, bhh_f, bih_r, bhh_r):
    H = bih_f.shape[0] // 4
    bf = bih_f + bhh_f
    br = bih_r + bhh_r
    cols = []
    for g in range(4):
        scale = 2.0 if g == 2 else 1.0
        cols.append(bf[g * H:(g + 1) * H] * scale)
        cols.append(br[g * H:(g + 1) * H] * scale)
    return jnp.concatenate(cols).reshape(1, 8 * H)


def bidir_lstm_encoder(seq_ids, p):
    H = HIDDEN
    B, T = BATCH, SEQLEN
    bf16 = jnp.bfloat16

    # usingw2v=False -> embedding lookup (gather left as JAX glue outside the kernel)
    x = jnp.take(p["embed"], seq_ids, axis=0).astype(jnp.float32)        # (B, T, E)
    x_tm = jnp.transpose(x, (1, 0, 2))                                   # (T, B, E) time-major
    # Row block s = [x(s) | x(T-1-s)] so the layer-0 slab matmul yields step-ordered
    # fused gate pre-activations directly (no in-kernel fwd/rev select).
    x2_slab = jnp.concatenate([x_tm, x_tm[::-1]], axis=-1).reshape(T * B, 2 * EMBED).astype(bf16)

    # ---- layer 0 fused weights ----
    wih0 = _fuse_blockdiag(p["wih0f"], p["wih0r"]).astype(bf16)          # (2E, 8H)
    whh0 = _fuse_blockdiag(p["whh0f"], p["whh0r"]).astype(bf16)          # (2H, 8H) block-diag
    b0 = _fuse_bias(p["bih0f"], p["bhh0f"], p["bih0r"], p["bhh0r"])      # (1, 8H) f32

    # ---- layer 1 fused input weight, split into the A/B operands that act on the
    # step-ordered / step-reversed layer-0 state slabs ----
    w1 = _fuse_ih(p["wih1f"], p["wih1r"])                                # (2H, 8H)
    row_top = (jnp.arange(2 * H) < H)[:, None]                           # rows fed by f0
    fwd_col = (((jnp.arange(8 * H) // H) % 2) == 0)[None, :]             # fwd gate columns
    a1 = jnp.where(row_top == fwd_col, w1, 0.0).astype(bf16)             # top&fwd | bot&rev
    b1w = jnp.where(row_top != fwd_col, w1, 0.0).astype(bf16)            # top&rev | bot&fwd
    whh1 = _fuse_blockdiag(p["whh1f"], p["whh1r"]).astype(bf16)
    b1 = _fuse_bias(p["bih1f"], p["bhh1f"], p["bih1r"], p["bhh1r"])      # (1, 8H) f32

    # ---- reform Linear(2H -> H), zero-padded halves (no lane concat in kernel) ----
    wrt = p["w_reform"].T                                                # (2H, H)
    zH = jnp.zeros((H, H), jnp.float32)
    wra = jnp.concatenate([wrt[0:H, :], zH], axis=0).astype(bf16)        # picks f1(T-1)
    wrb = jnp.concatenate([zH, wrt[H:2 * H, :]], axis=0).astype(bf16)    # picks r1(T-1)
    br = p["b_reform"].reshape(1, H)

    # ---- hoisted gate-activation fixup: sigmoid(z)*scale+offset (tanh on g columns) ----
    col = jnp.arange(8 * H)
    is_g = (col >= 4 * H) & (col < 6 * H)
    gscale = jnp.where(is_g, 2.0, 1.0).astype(jnp.float32).reshape(1, 8 * H)
    goff = jnp.where(is_g, -1.0, 0.0).astype(jnp.float32).reshape(1, 8 * H)

    # ---- BatchNorm1d (eval) folded to scale/shift ----
    bn_scale = (p["bn_gamma"] * jax.lax.rsqrt(p["bn_rvar"] + BN_EPS)).reshape(1, H)
    bn_shift = (p["bn_beta"] - p["bn_rmean"] * bn_scale[0]).reshape(1, H)

    args = [x2_slab,
            wih0, whh0, b0,
            a1, b1w, whh1, b1,
            wra, wrb, br,
            gscale, goff,
            bn_scale, bn_shift]

    return pl.pallas_call(
        bidir_lstm_encoder_kernel,
        out_shape=jax.ShapeDtypeStruct((B, H), jnp.float32),
        in_specs=[pl.BlockSpec(memory_space=pltpu.MemorySpace.VMEM) for _ in args],
        out_specs=pl.BlockSpec(memory_space=pltpu.MemorySpace.VMEM),
        scratch_shapes=[pltpu.VMEM((T * B, 8 * H), jnp.float32),   # per-step gate inputs
                        pltpu.VMEM((T * B, 2 * H), jnp.float32),   # layer-0 states (step order)
                        pltpu.VMEM((T * B, 2 * H), jnp.float32)],  # layer-0 states (reversed)
    )(*args)


if __name__ == "__main__":
    key = jax.random.PRNGKey(0)
    pkey, skey = jax.random.split(key)
    params = init_params(pkey)
    seq = jax.random.randint(skey, (BATCH, SEQLEN), 0, DICT, dtype=jnp.int32)

    out = bidir_lstm_encoder(seq, params)
    out = jax.block_until_ready(out)
    assert out.shape == (BATCH, HIDDEN) and out.dtype == jnp.float32
    assert bool(jnp.all(jnp.isfinite(out)))
    print("KERNEL_OK")
</pallas_src>

<mosaic_0001>
module attributes {stable_mosaic.version = 11 : i64} {
  func.func @bidir_lstm_encoder_kernel(%arg0: memref<16x64xbf16, #tpu.memory_space<vmem>>, %arg1: memref<64x256xbf16, #tpu.memory_space<vmem>>, %arg2: memref<64x256xbf16, #tpu.memory_space<vmem>>, %arg3: memref<1x256xf32, #tpu.memory_space<vmem>>, %arg4: memref<64x256xbf16, #tpu.memory_space<vmem>>, %arg5: memref<64x256xbf16, #tpu.memory_space<vmem>>, %arg6: memref<64x256xbf16, #tpu.memory_space<vmem>>, %arg7: memref<1x256xf32, #tpu.memory_space<vmem>>, %arg8: memref<64x32xbf16, #tpu.memory_space<vmem>>, %arg9: memref<64x32xbf16, #tpu.memory_space<vmem>>, %arg10: memref<1x32xf32, #tpu.memory_space<vmem>>, %arg11: memref<1x256xf32, #tpu.memory_space<vmem>>, %arg12: memref<1x256xf32, #tpu.memory_space<vmem>>, %arg13: memref<1x32xf32, #tpu.memory_space<vmem>>, %arg14: memref<1x32xf32, #tpu.memory_space<vmem>>, %arg15: memref<2x32xf32, #tpu.memory_space<vmem>>, %arg16: memref<16x256xf32, #tpu.memory_space<vmem>>, %arg17: memref<16x64xf32, #tpu.memory_space<vmem>>, %arg18: memref<16x64xf32, #tpu.memory_space<vmem>>) attributes {dimension_semantics = [], scalar_prefetch = 0 : i64, scratch_operands = 3 : i64, tpu.core_type = #tpu.core_type<tc>} {
    %c0 = arith.constant 0 : index
    %c0_0 = arith.constant 0 : index
    %0 = vector.load %arg11[%c0, %c0_0] : memref<1x256xf32, #tpu.memory_space<vmem>>, vector<1x256xf32>
    %c0_1 = arith.constant 0 : index
    %c0_2 = arith.constant 0 : index
    %1 = vector.load %arg12[%c0_1, %c0_2] : memref<1x256xf32, #tpu.memory_space<vmem>>, vector<1x256xf32>
    %c0_3 = arith.constant 0 : index
    %c0_4 = arith.constant 0 : index
    %2 = vector.load %arg0[%c0_3, %c0_4] : memref<16x64xbf16, #tpu.memory_space<vmem>>, vector<16x64xbf16>
    %c0_5 = arith.constant 0 : index
    %c0_6 = arith.constant 0 : index
    %3 = vector.load %arg1[%c0_5, %c0_6] : memref<64x256xbf16, #tpu.memory_space<vmem>>, vector<64x256xbf16>
    %cst = arith.constant dense<0.000000e+00> : vector<16x256xf32>
    %4 = tpu.matmul %2, %3, %cst {dimension_numbers = #tpu.dot_dimension_numbers<[1], [0], [0], [1], [0, 0, 1, 1], [], []>} : vector<16x64xbf16>, vector<64x256xbf16>, vector<16x256xf32> -> vector<16x256xf32>
    %c0_7 = arith.constant 0 : index
    %c0_8 = arith.constant 0 : index
    %5 = vector.load %arg3[%c0_7, %c0_8] : memref<1x256xf32, #tpu.memory_space<vmem>>, vector<1x256xf32>
    %6 = vector.broadcast %5 : vector<1x256xf32> to vector<16x256xf32>
    %7 = arith.addf %4, %6 : vector<16x256xf32>
    %c0_9 = arith.constant 0 : index
    %c0_10 = arith.constant 0 : index
    %8 = vector.load %arg16[%c0_9, %c0_10] : memref<16x256xf32, #tpu.memory_space<vmem>>, vector<16x256xf32>
    tpu.vector_store %arg16[%c0_9, %c0_10], %7 {strides = array<i32>} : memref<16x256xf32, #tpu.memory_space<vmem>>, vector<16x256xf32>,
    %c0_11 = arith.constant 0 : index
    %c0_12 = arith.constant 0 : index
    %9 = vector.load %arg2[%c0_11, %c0_12] : memref<64x256xbf16, #tpu.memory_space<vmem>>, vector<64x256xbf16>
    %cst_13 = arith.constant 0.000000e+00 : bf16
    %10 = vector.broadcast %cst_13 : bf16 to vector<2x64xbf16>
    %cst_14 = arith.constant 0.000000e+00 : f32
    %11 = vector.broadcast %cst_14 : f32 to vector<2x64xf32>
    %c0_15 = arith.constant 0 : index
    %c0_16 = arith.constant 0 : index
    %12 = vector.load %arg16[%c0_15, %c0_16] : memref<16x256xf32, #tpu.memory_space<vmem>>, vector<2x256xf32>
    %cst_17 = arith.constant dense<0.000000e+00> : vector<2x256xf32>
    %13 = tpu.matmul %10, %9, %cst_17 {dimension_numbers = #tpu.dot_dimension_numbers<[1], [0], [0], [1], [0, 0, 1, 1], [], []>} : vector<2x64xbf16>, vector<64x256xbf16>, vector<2x256xf32> -> vector<2x256xf32>
    %14 = arith.addf %12, %13 : vector<2x256xf32>
    %15 = arith.negf %14 : vector<2x256xf32>
    %16 = math.exp %15 : vector<2x256xf32>
    %cst_18 = arith.constant 1.000000e+00 : f32
    %17 = vector.broadcast %cst_18 : f32 to vector<2x256xf32>
    %18 = arith.addf %17, %16 : vector<2x256xf32>
    %19 = arith.divf %17, %18 : vector<2x256xf32>
    %20 = vector.broadcast %0 : vector<1x256xf32> to vector<2x256xf32>
    %21 = arith.mulf %19, %20 : vector<2x256xf32>
    %22 = vector.broadcast %1 : vector<1x256xf32> to vector<2x256xf32>
    %23 = arith.addf %21, %22 : vector<2x256xf32>
    %24 = vector.extract_strided_slice %23 {offsets = [0, 64], sizes = [2, 64], strides = [1, 1]} : vector<2x256xf32> to vector<2x64xf32>
    %25 = arith.mulf %24, %11 : vector<2x64xf32>
    %26 = vector.extract_strided_slice %23 {offsets = [0, 0], sizes = [2, 64], strides = [1, 1]} : vector<2x256xf32> to vector<2x64xf32>
    %27 = vector.extract_strided_slice %23 {offsets = [0, 128], sizes = [2, 64], strides = [1, 1]} : vector<2x256xf32> to vector<2x64xf32>
    %28 = arith.mulf %26, %27 : vector<2x64xf32>
    %29 = arith.addf %25, %28 : vector<2x64xf32>
    %30 = vector.extract_strided_slice %23 {offsets = [0, 192], sizes = [2, 64], strides = [1, 1]} : vector<2x256xf32> to vector<2x64xf32>
    %31 = math.tanh %29 : vector<2x64xf32>
    %32 = arith.mulf %30, %31 : vector<2x64xf32>
    %33 = arith.truncf %32 : vector<2x64xf32> to vector<2x64xbf16>
    %c0_19 = arith.constant 0 : index
    %c0_20 = arith.constant 0 : index
    %34 = vector.load %arg17[%c0_19, %c0_20] : memref<16x64xf32, #tpu.memory_space<vmem>>, vector<2x64xf32>
    tpu.vector_store %arg17[%c0_19, %c0_20], %32 {strides = array<i32>} : memref<16x64xf32, #tpu.memory_space<vmem>>, vector<2x64xf32>,
    %c14 = arith.constant 14 : index
    %c0_21 = arith.constant 0 : index
    %35 = vector.load %arg18[%c14, %c0_21] : memref<16x64xf32, #tpu.memory_space<vmem>>, vector<2x64xf32>
    tpu.vector_store %arg18[%c14, %c0_21], %32 {strides = array<i32>} : memref<16x64xf32, #tpu.memory_space<vmem>>, vector<2x64xf32>,
    %c2 = arith.constant 2 : index
    %c0_22 = arith.constant 0 : index
    %36 = vector.load %arg16[%c2, %c0_22] : memref<16x256xf32, #tpu.memory_space<vmem>>, vector<2x256xf32>
    %cst_23 = arith.constant dense<0.000000e+00> : vector<2x256xf32>
    %37 = tpu.matmul %33, %9, %cst_23 {dimension_numbers = #tpu.dot_dimension_numbers<[1], [0], [0], [1], [0, 0, 1, 1], [], []>} : vector<2x64xbf16>, vector<64x256xbf16>, vector<2x256xf32> -> vector<2x256xf32>
    %38 = arith.addf %36, %37 : vector<2x256xf32>
    %39 = arith.negf %38 : vector<2x256xf32>
    %40 = math.exp %39 : vector<2x256xf32>
    %cst_24 = arith.constant 1.000000e+00 : f32
    %41 = vector.broadcast %cst_24 : f32 to vector<2x256xf32>
    %42 = arith.addf %41, %40 : vector<2x256xf32>
    %43 = arith.divf %41, %42 : vector<2x256xf32>
    %44 = vector.broadcast %0 : vector<1x256xf32> to vector<2x256xf32>
    %45 = arith.mulf %43, %44 : vector<2x256xf32>
    %46 = vector.broadcast %1 : vector<1x256xf32> to vector<2x256xf32>
    %47 = arith.addf %45, %46 : vector<2x256xf32>
    %48 = vector.extract_strided_slice %47 {offsets = [0, 64], sizes = [2, 64], strides = [1, 1]} : vector<2x256xf32> to vector<2x64xf32>
    %49 = arith.mulf %48, %29 : vector<2x64xf32>
    %50 = vector.extract_strided_slice %47 {offsets = [0, 0], sizes = [2, 64], strides = [1, 1]} : vector<2x256xf32> to vector<2x64xf32>
    %51 = vector.extract_strided_slice %47 {offsets = [0, 128], sizes = [2, 64], strides = [1, 1]} : vector<2x256xf32> to vector<2x64xf32>
    %52 = arith.mulf %50, %51 : vector<2x64xf32>
    %53 = arith.addf %49, %52 : vector<2x64xf32>
    %54 = vector.extract_strided_slice %47 {offsets = [0, 192], sizes = [2, 64], strides = [1, 1]} : vector<2x256xf32> to vector<2x64xf32>
    %55 = math.tanh %53 : vector<2x64xf32>
    %56 = arith.mulf %54, %55 : vector<2x64xf32>
    %57 = arith.truncf %56 : vector<2x64xf32> to vector<2x64xbf16>
    %c2_25 = arith.constant 2 : index
    %c0_26 = arith.constant 0 : index
    %58 = vector.load %arg17[%c2_25, %c0_26] : memref<16x64xf32, #tpu.memory_space<vmem>>, vector<2x64xf32>
    tpu.vector_store %arg17[%c2_25, %c0_26], %56 {strides = array<i32>} : memref<16x64xf32, #tpu.memory_space<vmem>>, vector<2x64xf32>,
    %c12 = arith.constant 12 : index
    %c0_27 = arith.constant 0 : index
    %59 = vector.load %arg18[%c12, %c0_27] : memref<16x64xf32, #tpu.memory_space<vmem>>, vector<2x64xf32>
    tpu.vector_store %arg18[%c12, %c0_27], %56 {strides = array<i32>} : memref<16x64xf32, #tpu.memory_space<vmem>>, vector<2x64xf32>,
    %c4 = arith.constant 4 : index
    %c0_28 = arith.constant 0 : index
    %60 = vector.load %arg16[%c4, %c0_28] : memref<16x256xf32, #tpu.memory_space<vmem>>, vector<2x256xf32>
    %cst_29 = arith.constant dense<0.000000e+00> : vector<2x256xf32>
    %61 = tpu.matmul %57, %9, %cst_29 {dimension_numbers = #tpu.dot_dimension_numbers<[1], [0], [0], [1], [0, 0, 1, 1], [], []>} : vector<2x64xbf16>, vector<64x256xbf16>, vector<2x256xf32> -> vector<2x256xf32>
    %62 = arith.addf %60, %61 : vector<2x256xf32>
    %63 = arith.negf %62 : vector<2x256xf32>
    %64 = math.exp %63 : vector<2x256xf32>
    %cst_30 = arith.constant 1.000000e+00 : f32
    %65 = vector.broadcast %cst_30 : f32 to vector<2x256xf32>
    %66 = arith.addf %65, %64 : vector<2x256xf32>
    %67 = arith.divf %65, %66 : vector<2x256xf32>
    %68 = vector.broadcast %0 : vector<1x256xf32> to vector<2x256xf32>
    %69 = arith.mulf %67, %68 : vector<2x256xf32>
    %70 = vector.broadcast %1 : vector<1x256xf32> to vector<2x256xf32>
    %71 = arith.addf %69, %70 : vector<2x256xf32>
    %72 = vector.extract_strided_slice %71 {offsets = [0, 64], sizes = [2, 64], strides = [1, 1]} : vector<2x256xf32> to vector<2x64xf32>
    %73 = arith.mulf %72, %53 : vector<2x64xf32>
    %74 = vector.extract_strided_slice %71 {offsets = [0, 0], sizes = [2, 64], strides = [1, 1]} : vector<2x256xf32> to vector<2x64xf32>
    %75 = vector.extract_strided_slice %71 {offsets = [0, 128], sizes = [2, 64], strides = [1, 1]} : vector<2x256xf32> to vector<2x64xf32>
    %76 = arith.mulf %74, %75 : vector<2x64xf32>
    %77 = arith.addf %73, %76 : vector<2x64xf32>
    %78 = vector.extract_strided_slice %71 {offsets = [0, 192], sizes = [2, 64], strides = [1, 1]} : vector<2x256xf32> to vector<2x64xf32>
    %79 = math.tanh %77 : vector<2x64xf32>
    %80 = arith.mulf %78, %79 : vector<2x64xf32>
    %81 = arith.truncf %80 : vector<2x64xf32> to vector<2x64xbf16>
    %c4_31 = arith.constant 4 : index
    %c0_32 = arith.constant 0 : index
    %82 = vector.load %arg17[%c4_31, %c0_32] : memref<16x64xf32, #tpu.memory_space<vmem>>, vector<2x64xf32>
    tpu.vector_store %arg17[%c4_31, %c0_32], %80 {strides = array<i32>} : memref<16x64xf32, #tpu.memory_space<vmem>>, vector<2x64xf32>,
    %c10 = arith.constant 10 : index
    %c0_33 = arith.constant 0 : index
    %83 = vector.load %arg18[%c10, %c0_33] : memref<16x64xf32, #tpu.memory_space<vmem>>, vector<2x64xf32>
    tpu.vector_store %arg18[%c10, %c0_33], %80 {strides = array<i32>} : memref<16x64xf32, #tpu.memory_space<vmem>>, vector<2x64xf32>,
    %c6 = arith.constant 6 : index
    %c0_34 = arith.constant 0 : index
    %84 = vector.load %arg16[%c6, %c0_34] : memref<16x256xf32, #tpu.memory_space<vmem>>, vector<2x256xf32>
    %cst_35 = arith.constant dense<0.000000e+00> : vector<2x256xf32>
    %85 = tpu.matmul %81, %9, %cst_35 {dimension_numbers = #tpu.dot_dimension_numbers<[1], [0], [0], [1], [0, 0, 1, 1], [], []>} : vector<2x64xbf16>, vector<64x256xbf16>, vector<2x256xf32> -> vector<2x256xf32>
    %86 = arith.addf %84, %85 : vector<2x256xf32>
    %87 = arith.negf %86 : vector<2x256xf32>
    %88 = math.exp %87 : vector<2x256xf32>
    %cst_36 = arith.constant 1.000000e+00 : f32
    %89 = vector.broadcast %cst_36 : f32 to vector<2x256xf32>
    %90 = arith.addf %89, %88 : vector<2x256xf32>
    %91 = arith.divf %89, %90 : vector<2x256xf32>
    %92 = vector.broadcast %0 : vector<1x256xf32> to vector<2x256xf32>
    %93 = arith.mulf %91, %92 : vector<2x256xf32>
    %94 = vector.broadcast %1 : vector<1x256xf32> to vector<2x256xf32>
    %95 = arith.addf %93, %94 : vector<2x256xf32>
    %96 = vector.extract_strided_slice %95 {offsets = [0, 64], sizes = [2, 64], strides = [1, 1]} : vector<2x256xf32> to vector<2x64xf32>
    %97 = arith.mulf %96, %77 : vector<2x64xf32>
    %98 = vector.extract_strided_slice %95 {offsets = [0, 0], sizes = [2, 64], strides = [1, 1]} : vector<2x256xf32> to vector<2x64xf32>
    %99 = vector.extract_strided_slice %95 {offsets = [0, 128], sizes = [2, 64], strides = [1, 1]} : vector<2x256xf32> to vector<2x64xf32>
    %100 = arith.mulf %98, %99 : vector<2x64xf32>
    %101 = arith.addf %97, %100 : vector<2x64xf32>
    %102 = vector.extract_strided_slice %95 {offsets = [0, 192], sizes = [2, 64], strides = [1, 1]} : vector<2x256xf32> to vector<2x64xf32>
    %103 = math.tanh %101 : vector<2x64xf32>
    %104 = arith.mulf %102, %103 : vector<2x64xf32>
    %105 = arith.truncf %104 : vector<2x64xf32> to vector<2x64xbf16>
    %c6_37 = arith.constant 6 : index
    %c0_38 = arith.constant 0 : index
    %106 = vector.load %arg17[%c6_37, %c0_38] : memref<16x64xf32, #tpu.memory_space<vmem>>, vector<2x64xf32>
    tpu.vector_store %arg17[%c6_37, %c0_38], %104 {strides = array<i32>} : memref<16x64xf32, #tpu.memory_space<vmem>>, vector<2x64xf32>,
    %c8 = arith.constant 8 : index
    %c0_39 = arith.constant 0 : index
    %107 = vector.load %arg18[%c8, %c0_39] : memref<16x64xf32, #tpu.memory_space<vmem>>, vector<2x64xf32>
    tpu.vector_store %arg18[%c8, %c0_39], %104 {strides = array<i32>} : memref<16x64xf32, #tpu.memory_space<vmem>>, vector<2x64xf32>,
    %c8_40 = arith.constant 8 : index
    %c0_41 = arith.constant 0 : index
    %108 = vector.load %arg16[%c8_40, %c0_41] : memref<16x256xf32, #tpu.memory_space<vmem>>, vector<2x256xf32>
    %cst_42 = arith.constant dense<0.000000e+00> : vector<2x256xf32>
    %109 = tpu.matmul %105, %9, %cst_42 {dimension_numbers = #tpu.dot_dimension_numbers<[1], [0], [0], [1], [0, 0, 1, 1], [], []>} : vector<2x64xbf16>, vector<64x256xbf16>, vector<2x256xf32> -> vector<2x256xf32>
    %110 = arith.addf %108, %109 : vector<2x256xf32>
    %111 = arith.negf %110 : vector<2x256xf32>
    %112 = math.exp %111 : vector<2x256xf32>
    %cst_43 = arith.constant 1.000000e+00 : f32
    %113 = vector.broadcast %cst_43 : f32 to vector<2x256xf32>
    %114 = arith.addf %113, %112 : vector<2x256xf32>
    %115 = arith.divf %113, %114 : vector<2x256xf32>
    %116 = vector.broadcast %0 : vector<1x256xf32> to vector<2x256xf32>
    %117 = arith.mulf %115, %116 : vector<2x256xf32>
    %118 = vector.broadcast %1 : vector<1x256xf32> to vector<2x256xf32>
    %119 = arith.addf %117, %118 : vector<2x256xf32>
    %120 = vector.extract_strided_slice %119 {offsets = [0, 64], sizes = [2, 64], strides = [1, 1]} : vector<2x256xf32> to vector<2x64xf32>
    %121 = arith.mulf %120, %101 : vector<2x64xf32>
    %122 = vector.extract_strided_slice %119 {offsets = [0, 0], sizes = [2, 64], strides = [1, 1]} : vector<2x256xf32> to vector<2x64xf32>
    %123 = vector.extract_strided_slice %119 {offsets = [0, 128], sizes = [2, 64], strides = [1, 1]} : vector<2x256xf32> to vector<2x64xf32>
    %124 = arith.mulf %122, %123 : vector<2x64xf32>
    %125 = arith.addf %121, %124 : vector<2x64xf32>
    %126 = vector.extract_strided_slice %119 {offsets = [0, 192], sizes = [2, 64], strides = [1, 1]} : vector<2x256xf32> to vector<2x64xf32>
    %127 = math.tanh %125 : vector<2x64xf32>
    %128 = arith.mulf %126, %127 : vector<2x64xf32>
    %129 = arith.truncf %128 : vector<2x64xf32> to vector<2x64xbf16>
    %c8_44 = arith.constant 8 : index
    %c0_45 = arith.constant 0 : index
    %130 = vector.load %arg17[%c8_44, %c0_45] : memref<16x64xf32, #tpu.memory_space<vmem>>, vector<2x64xf32>
    tpu.vector_store %arg17[%c8_44, %c0_45], %128 {strides = array<i32>} : memref<16x64xf32, #tpu.memory_space<vmem>>, vector<2x64xf32>,
    %c6_46 = arith.constant 6 : index
    %c0_47 = arith.constant 0 : index
    %131 = vector.load %arg18[%c6_46, %c0_47] : memref<16x64xf32, #tpu.memory_space<vmem>>, vector<2x64xf32>
    tpu.vector_store %arg18[%c6_46, %c0_47], %128 {strides = array<i32>} : memref<16x64xf32, #tpu.memory_space<vmem>>, vector<2x64xf32>,
    %c10_48 = arith.constant 10 : index
    %c0_49 = arith.constant 0 : index
    %132 = vector.load %arg16[%c10_48, %c0_49] : memref<16x256xf32, #tpu.memory_space<vmem>>, vector<2x256xf32>
    %cst_50 = arith.constant dense<0.000000e+00> : vector<2x256xf32>
    %133 = tpu.matmul %129, %9, %cst_50 {dimension_numbers = #tpu.dot_dimension_numbers<[1], [0], [0], [1], [0, 0, 1, 1], [], []>} : vector<2x64xbf16>, vector<64x256xbf16>, vector<2x256xf32> -> vector<2x256xf32>
    %134 = arith.addf %132, %133 : vector<2x256xf32>
    %135 = arith.negf %134 : vector<2x256xf32>
    %136 = math.exp %135 : vector<2x256xf32>
    %cst_51 = arith.constant 1.000000e+00 : f32
    %137 = vector.broadcast %cst_51 : f32 to vector<2x256xf32>
    %138 = arith.addf %137, %136 : vector<2x256xf32>
    %139 = arith.divf %137, %138 : vector<2x256xf32>
    %140 = vector.broadcast %0 : vector<1x256xf32> to vector<2x256xf32>
    %141 = arith.mulf %139, %140 : vector<2x256xf32>
    %142 = vector.broadcast %1 : vector<1x256xf32> to vector<2x256xf32>
    %143 = arith.addf %141, %142 : vector<2x256xf32>
    %144 = vector.extract_strided_slice %143 {offsets = [0, 64], sizes = [2, 64], strides = [1, 1]} : vector<2x256xf32> to vector<2x64xf32>
    %145 = arith.mulf %144, %125 : vector<2x64xf32>
    %146 = vector.extract_strided_slice %143 {offsets = [0, 0], sizes = [2, 64], strides = [1, 1]} : vector<2x256xf32> to vector<2x64xf32>
    %147 = vector.extract_strided_slice %143 {offsets = [0, 128], sizes = [2, 64], strides = [1, 1]} : vector<2x256xf32> to vector<2x64xf32>
    %148 = arith.mulf %146, %147 : vector<2x64xf32>
    %149 = arith.addf %145, %148 : vector<2x64xf32>
    %150 = vector.extract_strided_slice %143 {offsets = [0, 192], sizes = [2, 64], strides = [1, 1]} : vector<2x256xf32> to vector<2x64xf32>
    %151 = math.tanh %149 : vector<2x64xf32>
    %152 = arith.mulf %150, %151 : vector<2x64xf32>
    %153 = arith.truncf %152 : vector<2x64xf32> to vector<2x64xbf16>
    %c10_52 = arith.constant 10 : index
    %c0_53 = arith.constant 0 : index
    %154 = vector.load %arg17[%c10_52, %c0_53] : memref<16x64xf32, #tpu.memory_space<vmem>>, vector<2x64xf32>
    tpu.vector_store %arg17[%c10_52, %c0_53], %152 {strides = array<i32>} : memref<16x64xf32, #tpu.memory_space<vmem>>, vector<2x64xf32>,
    %c4_54 = arith.constant 4 : index
    %c0_55 = arith.constant 0 : index
    %155 = vector.load %arg18[%c4_54, %c0_55] : memref<16x64xf32, #tpu.memory_space<vmem>>, vector<2x64xf32>
    tpu.vector_store %arg18[%c4_54, %c0_55], %152 {strides = array<i32>} : memref<16x64xf32, #tpu.memory_space<vmem>>, vector<2x64xf32>,
    %c12_56 = arith.constant 12 : index
    %c0_57 = arith.constant 0 : index
    %156 = vector.load %arg16[%c12_56, %c0_57] : memref<16x256xf32, #tpu.memory_space<vmem>>, vector<2x256xf32>
    %cst_58 = arith.constant dense<0.000000e+00> : vector<2x256xf32>
    %157 = tpu.matmul %153, %9, %cst_58 {dimension_numbers = #tpu.dot_dimension_numbers<[1], [0], [0], [1], [0, 0, 1, 1], [], []>} : vector<2x64xbf16>, vector<64x256xbf16>, vector<2x256xf32> -> vector<2x256xf32>
    %158 = arith.addf %156, %157 : vector<2x256xf32>
    %159 = arith.negf %158 : vector<2x256xf32>
    %160 = math.exp %159 : vector<2x256xf32>
    %cst_59 = arith.constant 1.000000e+00 : f32
    %161 = vector.broadcast %cst_59 : f32 to vector<2x256xf32>
    %162 = arith.addf %161, %160 : vector<2x256xf32>
    %163 = arith.divf %161, %162 : vector<2x256xf32>
    %164 = vector.broadcast %0 : vector<1x256xf32> to vector<2x256xf32>
    %165 = arith.mulf %163, %164 : vector<2x256xf32>
    %166 = vector.broadcast %1 : vector<1x256xf32> to vector<2x256xf32>
    %167 = arith.addf %165, %166 : vector<2x256xf32>
    %168 = vector.extract_strided_slice %167 {offsets = [0, 64], sizes = [2, 64], strides = [1, 1]} : vector<2x256xf32> to vector<2x64xf32>
    %169 = arith.mulf %168, %149 : vector<2x64xf32>
    %170 = vector.extract_strided_slice %167 {offsets = [0, 0], sizes = [2, 64], strides = [1, 1]} : vector<2x256xf32> to vector<2x64xf32>
    %171 = vector.extract_strided_slice %167 {offsets = [0, 128], sizes = [2, 64], strides = [1, 1]} : vector<2x256xf32> to vector<2x64xf32>
    %172 = arith.mulf %170, %171 : vector<2x64xf32>
    %173 = arith.addf %169, %172 : vector<2x64xf32>
    %174 = vector.extract_strided_slice %167 {offsets = [0, 192], sizes = [2, 64], strides = [1, 1]} : vector<2x256xf32> to vector<2x64xf32>
    %175 = math.tanh %173 : vector<2x64xf32>
    %176 = arith.mulf %174, %175 : vector<2x64xf32>
    %177 = arith.truncf %176 : vector<2x64xf32> to vector<2x64xbf16>
    %c12_60 = arith.constant 12 : index
    %c0_61 = arith.constant 0 : index
    %178 = vector.load %arg17[%c12_60, %c0_61] : memref<16x64xf32, #tpu.memory_space<vmem>>, vector<2x64xf32>
    tpu.vector_store %arg17[%c12_60, %c0_61], %176 {strides = array<i32>} : memref<16x64xf32, #tpu.memory_space<vmem>>, vector<2x64xf32>,
    %c2_62 = arith.constant 2 : index
    %c0_63 = arith.constant 0 : index
    %179 = vector.load %arg18[%c2_62, %c0_63] : memref<16x64xf32, #tpu.memory_space<vmem>>, vector<2x64xf32>
    tpu.vector_store %arg18[%c2_62, %c0_63], %176 {strides = array<i32>} : memref<16x64xf32, #tpu.memory_space<vmem>>, vector<2x64xf32>,
    %c14_64 = arith.constant 14 : index
    %c0_65 = arith.constant 0 : index
    %180 = vector.load %arg16[%c14_64, %c0_65] : memref<16x256xf32, #tpu.memory_space<vmem>>, vector<2x256xf32>
    %cst_66 = arith.constant dense<0.000000e+00> : vector<2x256xf32>
    %181 = tpu.matmul %177, %9, %cst_66 {dimension_numbers = #tpu.dot_dimension_numbers<[1], [0], [0], [1], [0, 0, 1, 1], [], []>} : vector<2x64xbf16>, vector<64x256xbf16>, vector<2x256xf32> -> vector<2x256xf32>
    %182 = arith.addf %180, %181 : vector<2x256xf32>
    %183 = arith.negf %182 : vector<2x256xf32>
    %184 = math.exp %183 : vector<2x256xf32>
    %cst_67 = arith.constant 1.000000e+00 : f32
    %185 = vector.broadcast %cst_67 : f32 to vector<2x256xf32>
    %186 = arith.addf %185, %184 : vector<2x256xf32>
    %187 = arith.divf %185, %186 : vector<2x256xf32>
    %188 = vector.broadcast %0 : vector<1x256xf32> to vector<2x256xf32>
    %189 = arith.mulf %187, %188 : vector<2x256xf32>
    %190 = vector.broadcast %1 : vector<1x256xf32> to vector<2x256xf32>
    %191 = arith.addf %189, %190 : vector<2x256xf32>
    %192 = vector.extract_strided_slice %191 {offsets = [0, 64], sizes = [2, 64], strides = [1, 1]} : vector<2x256xf32> to vector<2x64xf32>
    %193 = arith.mulf %192, %173 : vector<2x64xf32>
    %194 = vector.extract_strided_slice %191 {offsets = [0, 0], sizes = [2, 64], strides = [1, 1]} : vector<2x256xf32> to vector<2x64xf32>
    %195 = vector.extract_strided_slice %191 {offsets = [0, 128], sizes = [2, 64], strides = [1, 1]} : vector<2x256xf32> to vector<2x64xf32>
    %196 = arith.mulf %194, %195 : vector<2x64xf32>
    %197 = arith.addf %193, %196 : vector<2x64xf32>
    %198 = vector.extract_strided_slice %191 {offsets = [0, 192], sizes = [2, 64], strides = [1, 1]} : vector<2x256xf32> to vector<2x64xf32>
    %199 = math.tanh %197 : vector<2x64xf32>
    %200 = arith.mulf %198, %199 : vector<2x64xf32>
    %c14_68 = arith.constant 14 : index
    %c0_69 = arith.constant 0 : index
    %201 = vector.load %arg17[%c14_68, %c0_69] : memref<16x64xf32, #tpu.memory_space<vmem>>, vector<2x64xf32>
    tpu.vector_store %arg17[%c14_68, %c0_69], %200 {strides = array<i32>} : memref<16x64xf32, #tpu.memory_space<vmem>>, vector<2x64xf32>,
    %c0_70 = arith.constant 0 : index
    %c0_71 = arith.constant 0 : index
    %202 = vector.load %arg18[%c0_70, %c0_71] : memref<16x64xf32, #tpu.memory_space<vmem>>, vector<2x64xf32>
    tpu.vector_store %arg18[%c0_70, %c0_71], %200 {strides = array<i32>} : memref<16x64xf32, #tpu.memory_space<vmem>>, vector<2x64xf32>,
    %c0_72 = arith.constant 0 : index
    %c0_73 = arith.constant 0 : index
    %203 = vector.load %arg17[%c0_72, %c0_73] : memref<16x64xf32, #tpu.memory_space<vmem>>, vector<16x64xf32>
    %204 = arith.truncf %203 : vector<16x64xf32> to vector<16x64xbf16>
    %c0_74 = arith.constant 0 : index
    %c0_75 = arith.constant 0 : index
    %205 = vector.load %arg4[%c0_74, %c0_75] : memref<64x256xbf16, #tpu.memory_space<vmem>>, vector<64x256xbf16>
    %cst_76 = arith.constant dense<0.000000e+00> : vector<16x256xf32>
    %206 = tpu.matmul %204, %205, %cst_76 {dimension_numbers = #tpu.dot_dimension_numbers<[1], [0], [0], [1], [0, 0, 1, 1], [], []>} : vector<16x64xbf16>, vector<64x256xbf16>, vector<16x256xf32> -> vector<16x256xf32>
    %c0_77 = arith.constant 0 : index
    %c0_78 = arith.constant 0 : index
    %207 = vector.load %arg18[%c0_77, %c0_78] : memref<16x64xf32, #tpu.memory_space<vmem>>, vector<16x64xf32>
    %208 = arith.truncf %207 : vector<16x64xf32> to vector<16x64xbf16>
    %c0_79 = arith.constant 0 : index
    %c0_80 = arith.constant 0 : index
    %209 = vector.load %arg5[%c0_79, %c0_80] : memref<64x256xbf16, #tpu.memory_space<vmem>>, vector<64x256xbf16>
    %cst_81 = arith.constant dense<0.000000e+00> : vector<16x256xf32>
    %210 = tpu.matmul %208, %209, %cst_81 {dimension_numbers = #tpu.dot_dimension_numbers<[1], [0], [0], [1], [0, 0, 1, 1], [], []>} : vector<16x64xbf16>, vector<64x256xbf16>, vector<16x256xf32> -> vector<16x256xf32>
    %211 = arith.addf %206, %210 : vector<16x256xf32>
    %c0_82 = arith.constant 0 : index
    %c0_83 = arith.constant 0 : index
    %212 = vector.load %arg7[%c0_82, %c0_83] : memref<1x256xf32, #tpu.memory_space<vmem>>, vector<1x256xf32>
    %213 = vector.broadcast %212 : vector<1x256xf32> to vector<16x256xf32>
    %214 = arith.addf %211, %213 : vector<16x256xf32>
    %c0_84 = arith.constant 0 : index
    %c0_85 = arith.constant 0 : index
    %215 = vector.load %arg16[%c0_84, %c0_85] : memref<16x256xf32, #tpu.memory_space<vmem>>, vector<16x256xf32>
    tpu.vector_store %arg16[%c0_84, %c0_85], %214 {strides = array<i32>} : memref<16x256xf32, #tpu.memory_space<vmem>>, vector<16x256xf32>,
    %c0_86 = arith.constant 0 : index
    %c0_87 = arith.constant 0 : index
    %216 = vector.load %arg6[%c0_86, %c0_87] : memref<64x256xbf16, #tpu.memory_space<vmem>>, vector<64x256xbf16>
    %cst_88 = arith.constant 0.000000e+00 : bf16
    %217 = vector.broadcast %cst_88 : bf16 to vector<2x64xbf16>
    %cst_89 = arith.constant 0.000000e+00 : f32
    %218 = vector.broadcast %cst_89 : f32 to vector<2x64xf32>
    %c0_90 = arith.constant 0 : index
    %c0_91 = arith.constant 0 : index
    %219 = vector.load %arg16[%c0_90, %c0_91] : memref<16x256xf32, #tpu.memory_space<vmem>>, vector<2x256xf32>
    %cst_92 = arith.constant dense<0.000000e+00> : vector<2x256xf32>
    %220 = tpu.matmul %217, %216, %cst_92 {dimension_numbers = #tpu.dot_dimension_numbers<[1], [0], [0], [1], [0, 0, 1, 1], [], []>} : vector<2x64xbf16>, vector<64x256xbf16>, vector<2x256xf32> -> vector<2x256xf32>
    %221 = arith.addf %219, %220 : vector<2x256xf32>
    %222 = arith.negf %221 : vector<2x256xf32>
    %223 = math.exp %222 : vector<2x256xf32>
    %cst_93 = arith.constant 1.000000e+00 : f32
    %224 = vector.broadcast %cst_93 : f32 to vector<2x256xf32>
    %225 = arith.addf %224, %223 : vector<2x256xf32>
    %226 = arith.divf %224, %225 : vector<2x256xf32>
    %227 = vector.broadcast %0 : vector<1x256xf32> to vector<2x256xf32>
    %228 = arith.mulf %226, %227 : vector<2x256xf32>
    %229 = vector.broadcast %1 : vector<1x256xf32> to vector<2x256xf32>
    %230 = arith.addf %228, %229 : vector<2x256xf32>
    %231 = vector.extract_strided_slice %230 {offsets = [0, 64], sizes = [2, 64], strides = [1, 1]} : vector<2x256xf32> to vector<2x64xf32>
    %232 = arith.mulf %231, %218 : vector<2x64xf32>
    %233 = vector.extract_strided_slice %230 {offsets = [0, 0], sizes = [2, 64], strides = [1, 1]} : vector<2x256xf32> to vector<2x64xf32>
    %234 = vector.extract_strided_slice %230 {offsets = [0, 128], sizes = [2, 64], strides = [1, 1]} : vector<2x256xf32> to vector<2x64xf32>
    %235 = arith.mulf %233, %234 : vector<2x64xf32>
    %236 = arith.addf %232, %235 : vector<2x64xf32>
    %237 = vector.extract_strided_slice %230 {offsets = [0, 192], sizes = [2, 64], strides = [1, 1]} : vector<2x256xf32> to vector<2x64xf32>
    %238 = math.tanh %236 : vector<2x64xf32>
    %239 = arith.mulf %237, %238 : vector<2x64xf32>
    %240 = arith.truncf %239 : vector<2x64xf32> to vector<2x64xbf16>
    %c2_94 = arith.constant 2 : index
    %c0_95 = arith.constant 0 : index
    %241 = vector.load %arg16[%c2_94, %c0_95] : memref<16x256xf32, #tpu.memory_space<vmem>>, vector<2x256xf32>
    %cst_96 = arith.constant dense<0.000000e+00> : vector<2x256xf32>
    %242 = tpu.matmul %240, %216, %cst_96 {dimension_numbers = #tpu.dot_dimension_numbers<[1], [0], [0], [1], [0, 0, 1, 1], [], []>} : vector<2x64xbf16>, vector<64x256xbf16>, vector<2x256xf32> -> vector<2x256xf32>
    %243 = arith.addf %241, %242 : vector<2x256xf32>
    %244 = arith.negf %243 : vector<2x256xf32>
    %245 = math.exp %244 : vector<2x256xf32>
    %cst_97 = arith.constant 1.000000e+00 : f32
    %246 = vector.broadcast %cst_97 : f32 to vector<2x256xf32>
    %247 = arith.addf %246, %245 : vector<2x256xf32>
    %248 = arith.divf %246, %247 : vector<2x256xf32>
    %249 = vector.broadcast %0 : vector<1x256xf32> to vector<2x256xf32>
    %250 = arith.mulf %248, %249 : vector<2x256xf32>
    %251 = vector.broadcast %1 : vector<1x256xf32> to vector<2x256xf32>
    %252 = arith.addf %250, %251 : vector<2x256xf32>
    %253 = vector.extract_strided_slice %252 {offsets = [0, 64], sizes = [2, 64], strides = [1, 1]} : vector<2x256xf32> to vector<2x64xf32>
    %254 = arith.mulf %253, %236 : vector<2x64xf32>
    %255 = vector.extract_strided_slice %252 {offsets = [0, 0], sizes = [2, 64], strides = [1, 1]} : vector<2x256xf32> to vector<2x64xf32>
    %256 = vector.extract_strided_slice %252 {offsets = [0, 128], sizes = [2, 64], strides = [1, 1]} : vector<2x256xf32> to vector<2x64xf32>
    %257 = arith.mulf %255, %256 : vector<2x64xf32>
    %258 = arith.addf %254, %257 : vector<2x64xf32>
    %259 = vector.extract_strided_slice %252 {offsets = [0, 192], sizes = [2, 64], strides = [1, 1]} : vector<2x256xf32> to vector<2x64xf32>
    %260 = math.tanh %258 : vector<2x64xf32>
    %261 = arith.mulf %259, %260 : vector<2x64xf32>
    %262 = arith.truncf %261 : vector<2x64xf32> to vector<2x64xbf16>
    %c4_98 = arith.constant 4 : index
    %c0_99 = arith.constant 0 : index
    %263 = vector.load %arg16[%c4_98, %c0_99] : memref<16x256xf32, #tpu.memory_space<vmem>>, vector<2x256xf32>
    %cst_100 = arith.constant dense<0.000000e+00> : vector<2x256xf32>
    %264 = tpu.matmul %262, %216, %cst_100 {dimension_numbers = #tpu.dot_dimension_numbers<[1], [0], [0], [1], [0, 0, 1, 1], [], []>} : vector<2x64xbf16>, vector<64x256xbf16>, vector<2x256xf32> -> vector<2x256xf32>
    %265 = arith.addf %263, %264 : vector<2x256xf32>
    %266 = arith.negf %265 : vector<2x256xf32>
    %267 = math.exp %266 : vector<2x256xf32>
    %cst_101 = arith.constant 1.000000e+00 : f32
    %268 = vector.broadcast %cst_101 : f32 to vector<2x256xf32>
    %269 = arith.addf %268, %267 : vector<2x256xf32>
    %270 = arith.divf %268, %269 : vector<2x256xf32>
    %271 = vector.broadcast %0 : vector<1x256xf32> to vector<2x256xf32>
    %272 = arith.mulf %270, %271 : vector<2x256xf32>
    %273 = vector.broadcast %1 : vector<1x256xf32> to vector<2x256xf32>
    %274 = arith.addf %272, %273 : vector<2x256xf32>
    %275 = vector.extract_strided_slice %274 {offsets = [0, 64], sizes = [2, 64], strides = [1, 1]} : vector<2x256xf32> to vector<2x64xf32>
    %276 = arith.mulf %275, %258 : vector<2x64xf32>
    %277 = vector.extract_strided_slice %274 {offsets = [0, 0], sizes = [2, 64], strides = [1, 1]} : vector<2x256xf32> to vector<2x64xf32>
    %278 = vector.extract_strided_slice %274 {offsets = [0, 128], sizes = [2, 64], strides = [1, 1]} : vector<2x256xf32> to vector<2x64xf32>
    %279 = arith.mulf %277, %278 : vector<2x64xf32>
    %280 = arith.addf %276, %279 : vector<2x64xf32>
    %281 = vector.extract_strided_slice %274 {offsets = [0, 192], sizes = [2, 64], strides = [1, 1]} : vector<2x256xf32> to vector<2x64xf32>
    %282 = math.tanh %280 : vector<2x64xf32>
    %283 = arith.mulf %281, %282 : vector<2x64xf32>
    %284 = arith.truncf %283 : vector<2x64xf32> to vector<2x64xbf16>
    %c6_102 = arith.constant 6 : index
    %c0_103 = arith.constant 0 : index
    %285 = vector.load %arg16[%c6_102, %c0_103] : memref<16x256xf32, #tpu.memory_space<vmem>>, vector<2x256xf32>
    %cst_104 = arith.constant dense<0.000000e+00> : vector<2x256xf32>
    %286 = tpu.matmul %284, %216, %cst_104 {dimension_numbers = #tpu.dot_dimension_numbers<[1], [0], [0], [1], [0, 0, 1, 1], [], []>} : vector<2x64xbf16>, vector<64x256xbf16>, vector<2x256xf32> -> vector<2x256xf32>
    %287 = arith.addf %285, %286 : vector<2x256xf32>
    %288 = arith.negf %287 : vector<2x256xf32>
    %289 = math.exp %288 : vector<2x256xf32>
    %cst_105 = arith.constant 1.000000e+00 : f32
    %290 = vector.broadcast %cst_105 : f32 to vector<2x256xf32>
    %291 = arith.addf %290, %289 : vector<2x256xf32>
    %292 = arith.divf %290, %291 : vector<2x256xf32>
    %293 = vector.broadcast %0 : vector<1x256xf32> to vector<2x256xf32>
    %294 = arith.mulf %292, %293 : vector<2x256xf32>
    %295 = vector.broadcast %1 : vector<1x256xf32> to vector<2x256xf32>
    %296 = arith.addf %294, %295 : vector<2x256xf32>
    %297 = vector.extract_strided_slice %296 {offsets = [0, 64], sizes = [2, 64], strides = [1, 1]} : vector<2x256xf32> to vector<2x64xf32>
    %298 = arith.mulf %297, %280 : vector<2x64xf32>
    %299 = vector.extract_strided_slice %296 {offsets = [0, 0], sizes = [2, 64], strides = [1, 1]} : vector<2x256xf32> to vector<2x64xf32>
    %300 = vector.extract_strided_slice %296 {offsets = [0, 128], sizes = [2, 64], strides = [1, 1]} : vector<2x256xf32> to vector<2x64xf32>
    %301 = arith.mulf %299, %300 : vector<2x64xf32>
    %302 = arith.addf %298, %301 : vector<2x64xf32>
    %303 = vector.extract_strided_slice %296 {offsets = [0, 192], sizes = [2, 64], strides = [1, 1]} : vector<2x256xf32> to vector<2x64xf32>
    %304 = math.tanh %302 : vector<2x64xf32>
    %305 = arith.mulf %303, %304 : vector<2x64xf32>
    %306 = arith.truncf %305 : vector<2x64xf32> to vector<2x64xbf16>
    %c8_106 = arith.constant 8 : index
    %c0_107 = arith.constant 0 : index
    %307 = vector.load %arg16[%c8_106, %c0_107] : memref<16x256xf32, #tpu.memory_space<vmem>>, vector<2x256xf32>
    %cst_108 = arith.constant dense<0.000000e+00> : vector<2x256xf32>
    %308 = tpu.matmul %306, %216, %cst_108 {dimension_numbers = #tpu.dot_dimension_numbers<[1], [0], [0], [1], [0, 0, 1, 1], [], []>} : vector<2x64xbf16>, vector<64x256xbf16>, vector<2x256xf32> -> vector<2x256xf32>
    %309 = arith.addf %307, %308 : vector<2x256xf32>
    %310 = arith.negf %309 : vector<2x256xf32>
    %311 = math.exp %310 : vector<2x256xf32>
    %cst_109 = arith.constant 1.000000e+00 : f32
    %312 = vector.broadcast %cst_109 : f32 to vector<2x256xf32>
    %313 = arith.addf %312, %311 : vector<2x256xf32>
    %314 = arith.divf %312, %313 : vector<2x256xf32>
    %315 = vector.broadcast %0 : vector<1x256xf32> to vector<2x256xf32>
    %316 = arith.mulf %314, %315 : vector<2x256xf32>
    %317 = vector.broadcast %1 : vector<1x256xf32> to vector<2x256xf32>
    %318 = arith.addf %316, %317 : vector<2x256xf32>
    %319 = vector.extract_strided_slice %318 {offsets = [0, 64], sizes = [2, 64], strides = [1, 1]} : vector<2x256xf32> to vector<2x64xf32>
    %320 = arith.mulf %319, %302 : vector<2x64xf32>
    %321 = vector.extract_strided_slice %318 {offsets = [0, 0], sizes = [2, 64], strides = [1, 1]} : vector<2x256xf32> to vector<2x64xf32>
    %322 = vector.extract_strided_slice %318 {offsets = [0, 128], sizes = [2, 64], strides = [1, 1]} : vector<2x256xf32> to vector<2x64xf32>
    %323 = arith.mulf %321, %322 : vector<2x64xf32>
    %324 = arith.addf %320, %323 : vector<2x64xf32>
    %325 = vector.extract_strided_slice %318 {offsets = [0, 192], sizes = [2, 64], strides = [1, 1]} : vector<2x256xf32> to vector<2x64xf32>
    %326 = math.tanh %324 : vector<2x64xf32>
    %327 = arith.mulf %325, %326 : vector<2x64xf32>
    %328 = arith.truncf %327 : vector<2x64xf32> to vector<2x64xbf16>
    %c10_110 = arith.constant 10 : index
    %c0_111 = arith.constant 0 : index
    %329 = vector.load %arg16[%c10_110, %c0_111] : memref<16x256xf32, #tpu.memory_space<vmem>>, vector<2x256xf32>
    %cst_112 = arith.constant dense<0.000000e+00> : vector<2x256xf32>
    %330 = tpu.matmul %328, %216, %cst_112 {dimension_numbers = #tpu.dot_dimension_numbers<[1], [0], [0], [1], [0, 0, 1, 1], [], []>} : vector<2x64xbf16>, vector<64x256xbf16>, vector<2x256xf32> -> vector<2x256xf32>
    %331 = arith.addf %329, %330 : vector<2x256xf32>
    %332 = arith.negf %331 : vector<2x256xf32>
    %333 = math.exp %332 : vector<2x256xf32>
    %cst_113 = arith.constant 1.000000e+00 : f32
    %334 = vector.broadcast %cst_113 : f32 to vector<2x256xf32>
    %335 = arith.addf %334, %333 : vector<2x256xf32>
    %336 = arith.divf %334, %335 : vector<2x256xf32>
    %337 = vector.broadcast %0 : vector<1x256xf32> to vector<2x256xf32>
    %338 = arith.mulf %336, %337 : vector<2x256xf32>
    %339 = vector.broadcast %1 : vector<1x256xf32> to vector<2x256xf32>
    %340 = arith.addf %338, %339 : vector<2x256xf32>
    %341 = vector.extract_strided_slice %340 {offsets = [0, 64], sizes = [2, 64], strides = [1, 1]} : vector<2x256xf32> to vector<2x64xf32>
    %342 = arith.mulf %341, %324 : vector<2x64xf32>
    %343 = vector.extract_strided_slice %340 {offsets = [0, 0], sizes = [2, 64], strides = [1, 1]} : vector<2x256xf32> to vector<2x64xf32>
    %344 = vector.extract_strided_slice %340 {offsets = [0, 128], sizes = [2, 64], strides = [1, 1]} : vector<2x256xf32> to vector<2x64xf32>
    %345 = arith.mulf %343, %344 : vector<2x64xf32>
    %346 = arith.addf %342, %345 : vector<2x64xf32>
    %347 = vector.extract_strided_slice %340 {offsets = [0, 192], sizes = [2, 64], strides = [1, 1]} : vector<2x256xf32> to vector<2x64xf32>
    %348 = math.tanh %346 : vector<2x64xf32>
    %349 = arith.mulf %347, %348 : vector<2x64xf32>
    %350 = arith.truncf %349 : vector<2x64xf32> to vector<2x64xbf16>
    %c12_114 = arith.constant 12 : index
    %c0_115 = arith.constant 0 : index
    %351 = vector.load %arg16[%c12_114, %c0_115] : memref<16x256xf32, #tpu.memory_space<vmem>>, vector<2x256xf32>
    %cst_116 = arith.constant dense<0.000000e+00> : vector<2x256xf32>
    %352 = tpu.matmul %350, %216, %cst_116 {dimension_numbers = #tpu.dot_dimension_numbers<[1], [0], [0], [1], [0, 0, 1, 1], [], []>} : vector<2x64xbf16>, vector<64x256xbf16>, vector<2x256xf32> -> vector<2x256xf32>
    %353 = arith.addf %351, %352 : vector<2x256xf32>
    %354 = arith.negf %353 : vector<2x256xf32>
    %355 = math.exp %354 : vector<2x256xf32>
    %cst_117 = arith.constant 1.000000e+00 : f32
    %356 = vector.broadcast %cst_117 : f32 to vector<2x256xf32>
    %357 = arith.addf %356, %355 : vector<2x256xf32>
    %358 = arith.divf %356, %357 : vector<2x256xf32>
    %359 = vector.broadcast %0 : vector<1x256xf32> to vector<2x256xf32>
    %360 = arith.mulf %358, %359 : vector<2x256xf32>
    %361 = vector.broadcast %1 : vector<1x256xf32> to vector<2x256xf32>
    %362 = arith.addf %360, %361 : vector<2x256xf32>
    %363 = vector.extract_strided_slice %362 {offsets = [0, 64], sizes = [2, 64], strides = [1, 1]} : vector<2x256xf32> to vector<2x64xf32>
    %364 = arith.mulf %363, %346 : vector<2x64xf32>
    %365 = vector.extract_strided_slice %362 {offsets = [0, 0], sizes = [2, 64], strides = [1, 1]} : vector<2x256xf32> to vector<2x64xf32>
    %366 = vector.extract_strided_slice %362 {offsets = [0, 128], sizes = [2, 64], strides = [1, 1]} : vector<2x256xf32> to vector<2x64xf32>
    %367 = arith.mulf %365, %366 : vector<2x64xf32>
    %368 = arith.addf %364, %367 : vector<2x64xf32>
    %369 = vector.extract_strided_slice %362 {offsets = [0, 192], sizes = [2, 64], strides = [1, 1]} : vector<2x256xf32> to vector<2x64xf32>
    %370 = math.tanh %368 : vector<2x64xf32>
    %371 = arith.mulf %369, %370 : vector<2x64xf32>
    %372 = arith.truncf %371 : vector<2x64xf32> to vector<2x64xbf16>
    %c14_118 = arith.constant 14 : index
    %c0_119 = arith.constant 0 : index
    %373 = vector.load %arg16[%c14_118, %c0_119] : memref<16x256xf32, #tpu.memory_space<vmem>>, vector<2x256xf32>
    %cst_120 = arith.constant dense<0.000000e+00> : vector<2x256xf32>
    %374 = tpu.matmul %372, %216, %cst_120 {dimension_numbers = #tpu.dot_dimension_numbers<[1], [0], [0], [1], [0, 0, 1, 1], [], []>} : vector<2x64xbf16>, vector<64x256xbf16>, vector<2x256xf32> -> vector<2x256xf32>
    %375 = arith.addf %373, %374 : vector<2x256xf32>
    %376 = arith.negf %375 : vector<2x256xf32>
    %377 = math.exp %376 : vector<2x256xf32>
    %cst_121 = arith.constant 1.000000e+00 : f32
    %378 = vector.broadcast %cst_121 : f32 to vector<2x256xf32>
    %379 = arith.addf %378, %377 : vector<2x256xf32>
    %380 = arith.divf %378, %379 : vector<2x256xf32>
    %381 = vector.broadcast %0 : vector<1x256xf32> to vector<2x256xf32>
    %382 = arith.mulf %380, %381 : vector<2x256xf32>
    %383 = vector.broadcast %1 : vector<1x256xf32> to vector<2x256xf32>
    %384 = arith.addf %382, %383 : vector<2x256xf32>
    %385 = vector.extract_strided_slice %384 {offsets = [0, 64], sizes = [2, 64], strides = [1, 1]} : vector<2x256xf32> to vector<2x64xf32>
    %386 = arith.mulf %385, %368 : vector<2x64xf32>
    %387 = vector.extract_strided_slice %384 {offsets = [0, 0], sizes = [2, 64], strides = [1, 1]} : vector<2x256xf32> to vector<2x64xf32>
    %388 = vector.extract_strided_slice %384 {offsets = [0, 128], sizes = [2, 64], strides = [1, 1]} : vector<2x256xf32> to vector<2x64xf32>
    %389 = arith.mulf %387, %388 : vector<2x64xf32>
    %390 = arith.addf %386, %389 : vector<2x64xf32>
    %391 = vector.extract_strided_slice %384 {offsets = [0, 192], sizes = [2, 64], strides = [1, 1]} : vector<2x256xf32> to vector<2x64xf32>
    %392 = math.tanh %390 : vector<2x64xf32>
    %393 = arith.mulf %391, %392 : vector<2x64xf32>
    %394 = arith.truncf %393 : vector<2x64xf32> to vector<2x64xbf16>
    %c0_122 = arith.constant 0 : index
    %c0_123 = arith.constant 0 : index
    %395 = vector.load %arg8[%c0_122, %c0_123] : memref<64x32xbf16, #tpu.memory_space<vmem>>, vector<64x32xbf16>
    %cst_124 = arith.constant dense<0.000000e+00> : vector<2x32xf32>
    %396 = tpu.matmul %394, %395, %cst_124 {dimension_numbers = #tpu.dot_dimension_numbers<[1], [0], [0], [1], [0, 0, 1, 1], [], []>} : vector<2x64xbf16>, vector<64x32xbf16>, vector<2x32xf32> -> vector<2x32xf32>
    %c0_125 = arith.constant 0 : index
    %c0_126 = arith.constant 0 : index
    %397 = vector.load %arg9[%c0_125, %c0_126] : memref<64x32xbf16, #tpu.memory_space<vmem>>, vector<64x32xbf16>
    %cst_127 = arith.constant dense<0.000000e+00> : vector<2x32xf32>
    %398 = tpu.matmul %240, %397, %cst_127 {dimension_numbers = #tpu.dot_dimension_numbers<[1], [0], [0], [1], [0, 0, 1, 1], [], []>} : vector<2x64xbf16>, vector<64x32xbf16>, vector<2x32xf32> -> vector<2x32xf32>
    %399 = arith.addf %396, %398 : vector<2x32xf32>
    %c0_128 = arith.constant 0 : index
    %c0_129 = arith.constant 0 : index
    %400 = vector.load %arg10[%c0_128, %c0_129] : memref<1x32xf32, #tpu.memory_space<vmem>>, vector<1x32xf32>
    %401 = vector.broadcast %400 : vector<1x32xf32> to vector<2x32xf32>
    %402 = arith.addf %399, %401 : vector<2x32xf32>
    %403 = arith.negf %402 : vector<2x32xf32>
    %404 = math.exp %403 : vector<2x32xf32>
    %cst_130 = arith.constant 1.000000e+00 : f32
    %405 = vector.broadcast %cst_130 : f32 to vector<2x32xf32>
    %406 = arith.addf %405, %404 : vector<2x32xf32>
    %407 = arith.divf %405, %406 : vector<2x32xf32>
    %408 = arith.mulf %402, %407 : vector<2x32xf32>
    %c0_131 = arith.constant 0 : index
    %c0_132 = arith.constant 0 : index
    %409 = vector.load %arg13[%c0_131, %c0_132] : memref<1x32xf32, #tpu.memory_space<vmem>>, vector<1x32xf32>
    %410 = vector.broadcast %409 : vector<1x32xf32> to vector<2x32xf32>
    %411 = arith.mulf %408, %410 : vector<2x32xf32>
    %c0_133 = arith.constant 0 : index
    %c0_134 = arith.constant 0 : index
    %412 = vector.load %arg14[%c0_133, %c0_134] : memref<1x32xf32, #tpu.memory_space<vmem>>, vector<1x32xf32>
    %413 = vector.broadcast %412 : vector<1x32xf32> to vector<2x32xf32>
    %414 = arith.addf %411, %413 : vector<2x32xf32>
    %c0_135 = arith.constant 0 : index
    %c0_136 = arith.constant 0 : index
    %415 = vector.load %arg15[%c0_135, %c0_136] : memref<2x32xf32, #tpu.memory_space<vmem>>, vector<2x32xf32>
    tpu.vector_store %arg15[%c0_135, %c0_136], %414 {strides = array<i32>} : memref<2x32xf32, #tpu.memory_space<vmem>>, vector<2x32xf32>,
    return
  }
}

</mosaic_0001>

<llo_original>
// kernel: tpu_custom_call.1
$region0: #{tpu_custom_call.1}
  #allocation0 [shape = 'u32[]', space=smem, size = 0x4, offset = 0x4, fixed_abs, tag = 'smem constant byte address 0x4 - core index']
  #allocation1 [shape = 'u32[144,128]{1,0:T(1,128)}', space=vmem, size = 0x12000, scoped, tag = 'internal scratch']
  #allocation2 [shape = 'f32[16,256]{1,0:T(8,128)}', space=vmem, size = 0x4000, scoped, tag = 'scratch operand']
  #allocation3 [shape = 'f32[16,64]{1,0:T(8,128)}', space=vmem, size = 0x2000, scoped, tag = 'scratch operand']
  #allocation4 [shape = 'f32[16,64]{1,0:T(8,128)}', space=vmem, size = 0x2000, scoped, tag = 'scratch operand']
  %s0 = inlined_call_operand.vmem [shape: bf16[16,64], index: 0, kind: input, shape index: {}]
  %s1 = inlined_call_operand.vmem [shape: bf16[64,256], index: 1, kind: input, shape index: {}]
  %s2 = inlined_call_operand.hbm [shape: bf16[64,256], index: 2, kind: input, shape index: {}]
  %s3 = inlined_call_operand.vmem [shape: f32[1,256], index: 3, kind: input, shape index: {}]
  %s4 = inlined_call_operand.hbm [shape: bf16[64,256], index: 4, kind: input, shape index: {}]
  %s5 = inlined_call_operand.hbm [shape: bf16[64,256], index: 5, kind: input, shape index: {}]
  %s6 = inlined_call_operand.hbm [shape: bf16[64,256], index: 6, kind: input, shape index: {}]
  %s7 = inlined_call_operand.vmem [shape: f32[1,256], index: 7, kind: input, shape index: {}]
  %s8 = inlined_call_operand.vmem [shape: bf16[64,32], index: 8, kind: input, shape index: {}]
  %s9 = inlined_call_operand.vmem [shape: bf16[64,32], index: 9, kind: input, shape index: {}]
  %s10 = inlined_call_operand.vmem [shape: f32[1,32], index: 10, kind: input, shape index: {}]
  %s11 = inlined_call_operand.vmem [shape: f32[1,256], index: 11, kind: input, shape index: {}]
  %s12 = inlined_call_operand.vmem [shape: f32[1,256], index: 12, kind: input, shape index: {}]
  %s13 = inlined_call_operand.vmem [shape: f32[1,32], index: 13, kind: input, shape index: {}]
  %s14 = inlined_call_operand.vmem [shape: f32[1,32], index: 14, kind: input, shape index: {}]
  %s15 = inlined_call_operand.hbm [shape: f32[2,32], index: 15, kind: output, shape index: {}]
  %s16 = sld [smem:[#allocation0]]
  $region86: #{tpu_custom_call.1} parent=0
    _
  %s18 = ssub.s32 1, %s16
  %s19 = scalar_select 0, %s18, %s16
  $region1: #{tpu_custom_call.1} parent=0
    #allocation5 [shape = 'u8[32768]{0}', space=vmem, size = 0x8000, scoped, tag = 'input window, operand 2, single buffered']
    #allocation6 [shape = 's32[1]{0}', space=sflag, size = 0x4, scoped, tag = 'scoped memory for tpu_custom_call.1']
    #allocation7 [shape = 's32[1]{0}', space=sflag, size = 0x4, scoped, tag = 'scoped memory for tpu_custom_call.1']
    #allocation8 [shape = 'u8[32768]{0}', space=vmem, size = 0x8000, scoped, tag = 'input window, operand 4, single buffered']
    #allocation9 [shape = 's32[1]{0}', space=sflag, size = 0x4, scoped, tag = 'scoped memory for tpu_custom_call.1']
    #allocation10 [shape = 'u8[32768]{0}', space=vmem, size = 0x8000, scoped, tag = 'input window, operand 5, single buffered']
    #allocation11 [shape = 'u8[32768]{0}', space=vmem, size = 0x8000, scoped, tag = 'input window, operand 6, single buffered']
    #allocation12 [shape = 's32[1]{0}', space=sflag, size = 0x4, scoped, tag = 'scoped memory for tpu_custom_call.1']
    #allocation13 [shape = 'u8[1024]{0}', space=vmem, size = 0x400, scoped, tag = 'output window, operand 0, single buffered']
    %20 = vsyncpa [#allocation6], 0
    %21 = vsyncpa [#allocation9], 0
    %22 = vsyncpa [#allocation12], 0
    %23 = vsyncpa [#allocation7], 0
    // Predicated region
    $region2: #{tpu_custom_call.1} parent=1 // pred_check
      _
    $region3: #{tpu_custom_call.1} parent=1 // pred_check_branch
      %25 = sbr.rel (0) target = $region5
    $region4: #{tpu_custom_call.1} parent=1 // pred_region
      _
    $region5: #{tpu_custom_call.1} parent=1 // pred_fallthru
      _
    // Predicated region
    $region6: #{tpu_custom_call.1} parent=1 // pred_check
      _
    $region7: #{tpu_custom_call.1} parent=1 // pred_check_branch
      %27 = sbr.rel (0) target = $region9
    $region8: #{tpu_custom_call.1} parent=1 // pred_region
      _
    $region9: #{tpu_custom_call.1} parent=1 // pred_fallthru
      _
    // Predicated region
    $region10: #{tpu_custom_call.1} parent=1 // pred_check
      _
    $region11: #{tpu_custom_call.1} parent=1 // pred_check_branch
      %29 = sbr.rel (0) target = $region13
    $region12: #{tpu_custom_call.1} parent=1 // pred_region
      %s31 = ssub.s32 1024, 1024
      %32 = vsyncadd [#allocation6], %s31
      %s33 = sshll.u32 [#allocation5], 4
      %s34 = int_to_ptr.vmem [resolvable:$true] %s33
      %39 = dma.hbm_to_vmem [thread:$0]  %s2, 1024, %s34, [#allocation6], 128, 128, 8
    $region13: #{tpu_custom_call.1} parent=1 // pred_fallthru
      _
    // Predicated region
    $region14: #{tpu_custom_call.1} parent=1 // pred_check
      _
    $region15: #{tpu_custom_call.1} parent=1 // pred_check_branch
      %41 = sbr.rel (0) target = $region17
    $region16: #{tpu_custom_call.1} parent=1 // pred_region
      _
    $region17: #{tpu_custom_call.1} parent=1 // pred_fallthru
      _
    // Predicated region
    $region18: #{tpu_custom_call.1} parent=1 // pred_check
      _
    $region19: #{tpu_custom_call.1} parent=1 // pred_check_branch
      %43 = sbr.rel (0) target = $region21
    $region20: #{tpu_custom_call.1} parent=1 // pred_region
      %s45 = ssub.s32 1024, 1024
      %46 = vsyncadd [#allocation9], %s45
      %s47 = sshll.u32 [#allocation8], 4
      %s48 = int_to_ptr.vmem [resolvable:$true] %s47
      %53 = dma.hbm_to_vmem [thread:$0]  %s4, 1024, %s48, [#allocation9], 128, 128, 8
    $region21: #{tpu_custom_call.1} parent=1 // pred_fallthru
      _
    // Predicated region
    $region22: #{tpu_custom_call.1} parent=1 // pred_check
      _
    $region23: #{tpu_custom_call.1} parent=1 // pred_check_branch
      %55 = sbr.rel (0) target = $region25
    $region24: #{tpu_custom_call.1} parent=1 // pred_region
      %s57 = ssub.s32 1024, 1024
      %58 = vsyncadd [#allocation9], %s57
      %s59 = sshll.u32 [#allocation10], 4
      %s60 = int_to_ptr.vmem [resolvable:$true] %s59
      %65 = dma.hbm_to_vmem [thread:$0]  %s5, 1024, %s60, [#allocation9], 128, 128, 8
    $region25: #{tpu_custom_call.1} parent=1 // pred_fallthru
      _
    // Predicated region
    $region26: #{tpu_custom_call.1} parent=1 // pred_check
      _
    $region27: #{tpu_custom_call.1} parent=1 // pred_check_branch
      %67 = sbr.rel (0) target = $region29
    $region28: #{tpu_custom_call.1} parent=1 // pred_region
      %s69 = ssub.s32 1024, 1024
      %70 = vsyncadd [#allocation12], %s69
      %s71 = sshll.u32 [#allocation11], 4
      %s72 = int_to_ptr.vmem [resolvable:$true] %s71
      %77 = dma.hbm_to_vmem [thread:$0]  %s6, 1024, %s72, [#allocation12], 128, 128, 8
    $region29: #{tpu_custom_call.1} parent=1 // pred_fallthru
      _
    // Predicated region
    $region30: #{tpu_custom_call.1} parent=1 // pred_check
      _
    $region31: #{tpu_custom_call.1} parent=1 // pred_check_branch
      %79 = sbr.rel (0) target = $region33
    $region32: #{tpu_custom_call.1} parent=1 // pred_region
      _
    $region33: #{tpu_custom_call.1} parent=1 // pred_fallthru
      _
    // Predicated region
    $region34: #{tpu_custom_call.1} parent=1 // pred_check
      _
    $region35: #{tpu_custom_call.1} parent=1 // pred_check_branch
      %81 = sbr.rel (0) target = $region37
    $region36: #{tpu_custom_call.1} parent=1 // pred_region
      _
    $region37: #{tpu_custom_call.1} parent=1 // pred_fallthru
      _
    // Predicated region
    $region38: #{tpu_custom_call.1} parent=1 // pred_check
      _
    $region39: #{tpu_custom_call.1} parent=1 // pred_check_branch
      %83 = sbr.rel (0) target = $region41
    $region40: #{tpu_custom_call.1} parent=1 // pred_region
      _
    $region41: #{tpu_custom_call.1} parent=1 // pred_fallthru
      _
    // Predicated region
    $region42: #{tpu_custom_call.1} parent=1 // pred_check
      _
    $region43: #{tpu_custom_call.1} parent=1 // pred_check_branch
      %85 = sbr.rel (0) target = $region45
    $region44: #{tpu_custom_call.1} parent=1 // pred_region
      _
    $region45: #{tpu_custom_call.1} parent=1 // pred_fallthru
      _
    // Predicated region
    $region46: #{tpu_custom_call.1} parent=1 // pred_check
      _
    $region47: #{tpu_custom_call.1} parent=1 // pred_check_branch
      %87 = sbr.rel (0) target = $region49
    $region48: #{tpu_custom_call.1} parent=1 // pred_region
      _
    $region49: #{tpu_custom_call.1} parent=1 // pred_fallthru
      _
    // Predicated region
    $region50: #{tpu_custom_call.1} parent=1 // pred_check
      _
    $region51: #{tpu_custom_call.1} parent=1 // pred_check_branch
      %89 = sbr.rel (0) target = $region53
    $region52: #{tpu_custom_call.1} parent=1 // pred_region
      _
    $region53: #{tpu_custom_call.1} parent=1 // pred_fallthru
      _
    // Predicated region
    $region54: #{tpu_custom_call.1} parent=1 // pred_check
      _
    $region55: #{tpu_custom_call.1} parent=1 // pred_check_branch
      %91 = sbr.rel (0) target = $region57
    $region56: #{tpu_custom_call.1} parent=1 // pred_region
      _
    $region57: #{tpu_custom_call.1} parent=1 // pred_fallthru
      _
    // Predicated region
    $region58: #{tpu_custom_call.1} parent=1 // pred_check
      _
    $region59: #{tpu_custom_call.1} parent=1 // pred_check_branch
      %93 = sbr.rel (0) target = $region61
    $region60: #{tpu_custom_call.1} parent=1 // pred_region
      _
    $region61: #{tpu_custom_call.1} parent=1 // pred_fallthru
      _
    // Predicated region
    $region62: #{tpu_custom_call.1} parent=1 // pred_check
      _
    $region63: #{tpu_custom_call.1} parent=1 // pred_check_branch
      %95 = sbr.rel (0) target = $region65
    $region64: #{tpu_custom_call.1} parent=1 // pred_region
      %96 = dma.done [#allocation6], 1024
    $region65: #{tpu_custom_call.1} parent=1 // pred_fallthru
      _
    // Predicated region
    $region66: #{tpu_custom_call.1} parent=1 // pred_check
      _
    $region67: #{tpu_custom_call.1} parent=1 // pred_check_branch
      %98 = sbr.rel (0) target = $region69
    $region68: #{tpu_custom_call.1} parent=1 // pred_region
      %99 = dma.done [#allocation9], 1024
    $region69: #{tpu_custom_call.1} parent=1 // pred_fallthru
      _
    // Predicated region
    $region70: #{tpu_custom_call.1} parent=1 // pred_check
      _
    $region71: #{tpu_custom_call.1} parent=1 // pred_check_branch
      %101 = sbr.rel (0) target = $region73
    $region72: #{tpu_custom_call.1} parent=1 // pred_region
      %102 = dma.done [#allocation9], 1024
    $region73: #{tpu_custom_call.1} parent=1 // pred_fallthru
      _
    // Predicated region
    $region74: #{tpu_custom_call.1} parent=1 // pred_check
      _
    $region75: #{tpu_custom_call.1} parent=1 // pred_check_branch
      %104 = sbr.rel (0) target = $region77
    $region76: #{tpu_custom_call.1} parent=1 // pred_region
      %105 = dma.done [#allocation12], 1024
    $region77: #{tpu_custom_call.1} parent=1 // pred_fallthru
      _
    %v107 = vld [vmem:[%s11] sm:$0x3]
    %v108 = vld [vmem:[%s12] sm:$0x3]
    %v109 = vld [vmem:[%s0] sm:$0xf]
    %v110 = vld [vmem:[%s0 + $0x4] sm:$0xf]
    %v111 = vld [vmem:[%s1] sm:$0xff]
    %v112 = vld [vmem:[%s1 + $0x8] sm:$0xff]
    %v113 = vld [vmem:[%s1 + $0x10] sm:$0xff]
    %v114 = vld [vmem:[%s1 + $0x18] sm:$0xff]
    %v115 = vld [vmem:[%s1 + $0x20] sm:$0xff]
    %v116 = vld [vmem:[%s1 + $0x28] sm:$0xff]
    %v117 = vld [vmem:[%s1 + $0x30] sm:$0xff]
    %v118 = vld [vmem:[%s1 + $0x38] sm:$0xff]
    %v119 = vld [vmem:[%s3] sm:$0x3]
    %v121 = vlaneseq
    %v122 = vshrl.u32 %v121, 7
    %v123 = vsub.s32 0, %v122
    %v124 = vrot.slane %v119, %v123
    %v125 = vlaneseq
    %v126 = vshrl.u32 %v125, 7
    %v127 = vsub.s32 1, %v126
    %v128 = vrot.slane %v119, %v127
    %v133 = vunpack.c.l.b16 %v109
    %v134 = vunpack.c.l.b16 %v110
    %v135 = vpack.c.b16 %v134, %v133
    %v144 = vunpack.c.l.b16 %v111
    %v145 = vunpack.c.h.b16 %v111
    %v146 = vunpack.c.l.b16 %v112
    %v147 = vunpack.c.h.b16 %v112
    %v148 = vunpack.c.l.b16 %v113
    %v149 = vunpack.c.h.b16 %v113
    %v150 = vunpack.c.l.b16 %v114
    %v151 = vunpack.c.h.b16 %v114
    %v152 = vunpack.c.l.b16 %v115
    %v153 = vunpack.c.h.b16 %v115
    %v154 = vunpack.c.l.b16 %v116
    %v155 = vunpack.c.h.b16 %v116
    %v156 = vunpack.c.l.b16 %v117
    %v157 = vunpack.c.h.b16 %v117
    %v158 = vunpack.c.l.b16 %v118
    %v159 = vunpack.c.h.b16 %v118
    %v160 = vpack.c.b16 %v146, %v144
    %v161 = vpack.c.b16 %v147, %v145
    %v162 = vpack.c.b16 %v150, %v148
    %v163 = vpack.c.b16 %v151, %v149
    %v164 = vpack.c.b16 %v154, %v152
    %v165 = vpack.c.b16 %v155, %v153
    %v166 = vpack.c.b16 %v158, %v156
    %v167 = vpack.c.b16 %v159, %v157
    %vm176 = vcmask 523264
    %v178 = vsel %vm176, %v135, 0
    %180 = vmatprep.subr.bf16.mxu0 %v161
    %181 = vmatpush1.bf16.msra.mxu0 %v160
    %182 = vmatprep.subr.bf16.mxu0 %v163
    %183 = vmatpush1.bf16.msra.mxu0 %v162
    %184 = vmatprep.subr.bf16.mxu0 %v165
    %185 = vmatpush1.bf16.msra.mxu0 %v164
    %186 = vmatprep.subr.bf16.mxu0 %v167
    %187 = vmatpush1.bf16.msra.mxu0 %v166
    %188 = vmatprep.subr.bf16.mxu0 0
    %189 = vmatpush1.bf16.msra.mxu0 0
    %190 = vmatprep.subr.bf16.mxu0 0
    %191 = vmatpush1.bf16.msra.mxu0 0
    %192 = vmatprep.subr.bf16.mxu0 0
    %193 = vmatpush1.bf16.msra.mxu0 0
    %194 = vmatprep.subr.bf16.mxu0 0
    %195 = vmatpush1.bf16.msra.mxu0 0
    %196 = vmatprep.subr.bf16.mxu0 0
    %197 = vmatpush1.bf16.msra.mxu0 0
    %198 = vmatprep.subr.bf16.mxu0 0
    %199 = vmatpush1.bf16.msra.mxu0 0
    %200 = vmatprep.subr.bf16.mxu0 0
    %201 = vmatpush1.bf16.msra.mxu0 0
    %202 = vmatprep.subr.bf16.mxu0 0
    %203 = vmatpush1.bf16.msra.mxu0 0
    %204 = vmatprep.subr.bf16.mxu0 0
    %205 = vmatpush1.bf16.msra.mxu0 0
    %206 = vmatprep.subr.bf16.mxu0 0
    %207 = vmatpush1.bf16.msra.mxu0 0
    %208 = vmatprep.subr.bf16.mxu0 0
    %209 = vmatpush1.bf16.msra.mxu0 0
    %210 = vmatprep.subr.bf16.mxu0 0
    %211 = vmatpush1.bf16.msra.mxu0 0
    %212 = vmatprep.mubr.bf16.mxu0 0
    %213 = vmatmul.mubr.bf16.gmra.mrb[0].mxu0 %v178
    %v214 = vpop.f32.mrb[0].mxu0
    %v215 = vadd.f32 %v124, %v214
    %v216 = vpop.f32.mrb[0].mxu0
    %v217 = vadd.f32 %v128, %v216
    %v218 = vpop.f32.mrb[0].mxu0
    %v219 = vadd.f32 %v124, %v218
    %v220 = vpop.f32.mrb[0].mxu0
    %v221 = vadd.f32 %v128, %v220
    %222 = vdwg.mxu0
    %223 = vst [vmem:[#allocation2] sm:$0xff] %v215
    %224 = vst [vmem:[#allocation2 + $0x8] sm:$0xff] %v217
    %225 = vst [vmem:[#allocation2 + $0x10] sm:$0xff] %v219
    %226 = vst [vmem:[#allocation2 + $0x18] sm:$0xff] %v221
    %v227 = vld [vmem:[#allocation5] sm:$0xff]
    %v228 = vld [vmem:[#allocation5 + $0x8] sm:$0xff]
    %v229 = vld [vmem:[#allocation5 + $0x10] sm:$0xff]
    %v230 = vld [vmem:[#allocation5 + $0x18] sm:$0xff]
    %v231 = vld [vmem:[#allocation5 + $0x20] sm:$0xff]
    %v232 = vld [vmem:[#allocation5 + $0x28] sm:$0xff]
    %v233 = vld [vmem:[#allocation5 + $0x30] sm:$0xff]
    %v234 = vld [vmem:[#allocation5 + $0x38] sm:$0xff]
    %v235 = vld [vmem:[#allocation2] sm:$0x3]
    %v236 = vld [vmem:[#allocation2 + $0x8] sm:$0x3]
    %v245 = vunpack.c.l.b16 %v227
    %v246 = vunpack.c.h.b16 %v227
    %v247 = vunpack.c.l.b16 %v228
    %v248 = vunpack.c.h.b16 %v228
    %v249 = vunpack.c.l.b16 %v229
    %v250 = vunpack.c.h.b16 %v229
    %v251 = vunpack.c.l.b16 %v230
    %v252 = vunpack.c.h.b16 %v230
    %v253 = vunpack.c.l.b16 %v231
    %v254 = vunpack.c.h.b16 %v231
    %v255 = vunpack.c.l.b16 %v232
    %v256 = vunpack.c.h.b16 %v232
    %v257 = vunpack.c.l.b16 %v233
    %v258 = vunpack.c.h.b16 %v233
    %v259 = vunpack.c.l.b16 %v234
    %v260 = vunpack.c.h.b16 %v234
    %v261 = vpack.c.b16 %v247, %v245
    %v262 = vpack.c.b16 %v248, %v246
    %v263 = vpack.c.b16 %v251, %v249
    %v264 = vpack.c.b16 %v252, %v250
    %v265 = vpack.c.b16 %v255, %v253
    %v266 = vpack.c.b16 %v256, %v254
    %v267 = vpack.c.b16 %v259, %v257
    %v268 = vpack.c.b16 %v260, %v258
    %v278 = vsel %vm176, 0, 0
    %280 = vmatprep.subr.bf16.mxu0 %v262
    %281 = vmatpush1.bf16.msra.mxu0 %v261
    %282 = vmatprep.subr.bf16.mxu0 %v264
    %283 = vmatpush1.bf16.msra.mxu0 %v263
    %284 = vmatprep.subr.bf16.mxu0 %v266
    %285 = vmatpush1.bf16.msra.mxu0 %v265
    %286 = vmatprep.subr.bf16.mxu0 %v268
    %287 = vmatpush1.bf16.msra.mxu0 %v267
    %288 = vmatprep.subr.bf16.mxu0 0
    %289 = vmatpush1.bf16.msra.mxu0 0
    %290 = vmatprep.subr.bf16.mxu0 0
    %291 = vmatpush1.bf16.msra.mxu0 0
    %292 = vmatprep.subr.bf16.mxu0 0
    %293 = vmatpush1.bf16.msra.mxu0 0
    %294 = vmatprep.subr.bf16.mxu0 0
    %295 = vmatpush1.bf16.msra.mxu0 0
    %296 = vmatprep.subr.bf16.mxu0 0
    %297 = vmatpush1.bf16.msra.mxu0 0
    %298 = vmatprep.subr.bf16.mxu0 0
    %299 = vmatpush1.bf16.msra.mxu0 0
    %300 = vmatprep.subr.bf16.mxu0 0
    %301 = vmatpush1.bf16.msra.mxu0 0
    %302 = vmatprep.subr.bf16.mxu0 0
    %303 = vmatpush1.bf16.msra.mxu0 0
    %304 = vmatprep.subr.bf16.mxu0 0
    %305 = vmatpush1.bf16.msra.mxu0 0
    %306 = vmatprep.subr.bf16.mxu0 0
    %307 = vmatpush1.bf16.msra.mxu0 0
    %308 = vmatprep.subr.bf16.mxu0 0
    %309 = vmatpush1.bf16.msra.mxu0 0
    %310 = vmatprep.subr.bf16.mxu0 0
    %311 = vmatpush1.bf16.msra.mxu0 0
    %312 = vmatprep.mubr.bf16.mxu0 0
    %313 = vmatmul.mubr.bf16.gmra.mrb[0].mxu0 %v278
    %v314 = vpop.f32.mrb[0].mxu0
    %v315 = vadd.f32 0.0, %v314
    %v316 = vpop.f32.mrb[0].mxu0
    %v317 = vadd.f32 0.0, %v316
    %v318 = vpop.f32.mrb[0].mxu0
    %v319 = vpop.f32.mrb[0].mxu0
    %320 = vdwg.mxu0
    %v321 = vadd.f32 %v235, %v315
    %v322 = vadd.f32 %v236, %v317
    %v323 = vxor.u32 %v321, 2147483648
    %v324 = vxor.u32 %v322, 2147483648
    %v325 = vmul.f32 %v323, 1.442695
    %v326 = vpow.pop %v325
    %v327 = vmul.f32 %v324, 1.442695
    %v328 = vpow.pop %v327
    %v329 = vadd.f32 %v326, 1.0
    %v330 = vadd.f32 %v328, 1.0
    %v331 = vrcp.pop %v329
    %v332 = vmul.f32 1.0, %v331
    %v333 = vrcp.pop %v330
    %v334 = vmul.f32 1.0, %v333
    %v336 = vlaneseq
    %v337 = vshrl.u32 %v336, 7
    %v338 = vsub.s32 0, %v337
    %v339 = vrot.slane %v107, %v338
    %v340 = vlaneseq
    %v341 = vshrl.u32 %v340, 7
    %v342 = vsub.s32 1, %v341
    %v343 = vrot.slane %v107, %v342
    %v346 = vmul.f32 %v332, %v339
    %v347 = vmul.f32 %v334, %v343
    %v349 = vlaneseq
    %v350 = vshrl.u32 %v349, 7
    %v351 = vsub.s32 0, %v350
    %v352 = vrot.slane %v108, %v351
    %v353 = vlaneseq
    %v354 = vshrl.u32 %v353, 7
    %v355 = vsub.s32 1, %v354
    %v356 = vrot.slane %v108, %v355
    %v359 = vadd.f32 %v346, %v352
    %v360 = vadd.f32 %v347, %v356
    %v361 = vmul.f32 %v359, 0.0
    %v362 = vmul.f32 %v359, %v360
    %364 = vrot.lane.b32.xlu0 %v362, 64
    %v365 = vpop.permute.xlu0 %364
    %v367 = vadd.f32 %v361, %v365
    %v368 = vtanh.pop %v367
    %v369 = vmul.f32 %v360, %v368
    %v370 = vpack.c.bf16 %v369, %v369
    %372 = vrot.lane.b32.xlu0 %v369, 64
    %v373 = vpop.permute.xlu0 %372
    %vm375 = vcmask 517120
    %376 = vst.msk [vmem:[#allocation3] sm:$0x3] %vm375, %v373
    %377 = vst.msk [vmem:[#allocation4 + $0xe] sm:$0x3] %vm375, %v373
    %v378 = vld [vmem:[#allocation2] sm:$0xc]
    %v379 = vld [vmem:[#allocation2 + $0x8] sm:$0xc]
    %381 = vrot.lane.b32.xlu0 %v370, 64
    %v382 = vpop.permute.xlu0 %381
    %v384 = vsel %vm176, %v382, 0
    %386 = vmatprep.subr.bf16.mxu0 %v262
    %387 = vmatpush1.bf16.msra.mxu0 %v261
    %388 = vmatprep.subr.bf16.mxu0 %v264
    %389 = vmatpush1.bf16.msra.mxu0 %v263
    %390 = vmatprep.subr.bf16.mxu0 %v266
    %391 = vmatpush1.bf16.msra.mxu0 %v265
    %392 = vmatprep.subr.bf16.mxu0 %v268
    %393 = vmatpush1.bf16.msra.mxu0 %v267
    %394 = vmatprep.subr.bf16.mxu0 0
    %395 = vmatpush1.bf16.msra.mxu0 0
    %396 = vmatprep.subr.bf16.mxu0 0
    %397 = vmatpush1.bf16.msra.mxu0 0
    %398 = vmatprep.subr.bf16.mxu0 0
    %399 = vmatpush1.bf16.msra.mxu0 0
    %400 = vmatprep.subr.bf16.mxu0 0
    %401 = vmatpush1.bf16.msra.mxu0 0
    %402 = vmatprep.subr.bf16.mxu0 0
    %403 = vmatpush1.bf16.msra.mxu0 0
    %404 = vmatprep.subr.bf16.mxu0 0
    %405 = vmatpush1.bf16.msra.mxu0 0
    %406 = vmatprep.subr.bf16.mxu0 0
    %407 = vmatpush1.bf16.msra.mxu0 0
    %408 = vmatprep.subr.bf16.mxu0 0
    %409 = vmatpush1.bf16.msra.mxu0 0
    %410 = vmatprep.subr.bf16.mxu0 0
    %411 = vmatpush1.bf16.msra.mxu0 0
    %412 = vmatprep.subr.bf16.mxu0 0
    %413 = vmatpush1.bf16.msra.mxu0 0
    %414 = vmatprep.subr.bf16.mxu0 0
    %415 = vmatpush1.bf16.msra.mxu0 0
    %416 = vmatprep.subr.bf16.mxu0 0
    %417 = vmatpush1.bf16.msra.mxu0 0
    %418 = vmatprep.mubr.bf16.mxu0 0
    %419 = vmatmul.mubr.bf16.gmra.mrb[0].mxu0 %v384
    %v420 = vpop.f32.mrb[0].mxu0
    %v421 = vadd.f32 0.0, %v420
    %v422 = vpop.f32.mrb[0].mxu0
    %v423 = vadd.f32 0.0, %v422
    %v424 = vpop.f32.mrb[0].mxu0
    %v425 = vpop.f32.mrb[0].mxu0
    %426 = vdwg.mxu0
    %v429 = vrot.slane %v421, 6
    %v430 = vrot.slane %v423, 6
    %v433 = vadd.f32 %v378, %v429
    %v434 = vadd.f32 %v379, %v430
    %v435 = vxor.u32 %v433, 2147483648
    %v436 = vxor.u32 %v434, 2147483648
    %v437 = vmul.f32 %v435, 1.442695
    %v438 = vpow.pop %v437
    %v439 = vmul.f32 %v436, 1.442695
    %v440 = vpow.pop %v439
    %v441 = vadd.f32 %v438, 1.0
    %v442 = vadd.f32 %v440, 1.0
    %v443 = vrcp.pop %v441
    %v444 = vmul.f32 1.0, %v443
    %v445 = vrcp.pop %v442
    %v446 = vmul.f32 1.0, %v445
    %v447 = vmul.f32 %v444, %v339
    %v448 = vmul.f32 %v446, %v343
    %v449 = vadd.f32 %v447, %v352
    %v450 = vadd.f32 %v448, %v356
    %v452 = vrot.slane %v367, 6
    %v454 = vmul.f32 %v449, %v452
    %v455 = vmul.f32 %v449, %v450
    %457 = vrot.lane.b32.xlu0 %v455, 64
    %v458 = vpop.permute.xlu0 %457
    %v460 = vadd.f32 %v454, %v458
    %v461 = vtanh.pop %v460
    %v462 = vmul.f32 %v450, %v461
    %v463 = vpack.c.bf16 %v462, %v462
    %465 = vrot.lane.b32.xlu0 %v462, 64
    %v466 = vpop.permute.xlu0 %465
    %vm468 = vcmask 519170
    %469 = vst.msk [vmem:[#allocation3] sm:$0xc] %vm468, %v466
    %470 = vst.msk [vmem:[#allocation4 + $0xa] sm:$0xc] %vm468, %v466
    %v471 = vld [vmem:[#allocation2] sm:$0x30]
    %v472 = vld [vmem:[#allocation2 + $0x8] sm:$0x30]
    %v474 = vrot.slane %v463, 1
    %475 = vrot.lane.b32.xlu0 %v474, 64
    %v476 = vpop.permute.xlu0 %475
    %v478 = vsel %vm176, %v476, 0
    %480 = vmatprep.subr.bf16.mxu0 %v262
    %481 = vmatpush1.bf16.msra.mxu0 %v261
    %482 = vmatprep.subr.bf16.mxu0 %v264
    %483 = vmatpush1.bf16.msra.mxu0 %v263
    %484 = vmatprep.subr.bf16.mxu0 %v266
    %485 = vmatpush1.bf16.msra.mxu0 %v265
    %486 = vmatprep.subr.bf16.mxu0 %v268
    %487 = vmatpush1.bf16.msra.mxu0 %v267
    %488 = vmatprep.subr.bf16.mxu0 0
    %489 = vmatpush1.bf16.msra.mxu0 0
    %490 = vmatprep.subr.bf16.mxu0 0
    %491 = vmatpush1.bf16.msra.mxu0 0
    %492 = vmatprep.subr.bf16.mxu0 0
    %493 = vmatpush1.bf16.msra.mxu0 0
    %494 = vmatprep.subr.bf16.mxu0 0
    %495 = vmatpush1.bf16.msra.mxu0 0
    %496 = vmatprep.subr.bf16.mxu0 0
    %497 = vmatpush1.bf16.msra.mxu0 0
    %498 = vmatprep.subr.bf16.mxu0 0
    %499 = vmatpush1.bf16.msra.mxu0 0
    %500 = vmatprep.subr.bf16.mxu0 0
    %501 = vmatpush1.bf16.msra.mxu0 0
    %502 = vmatprep.subr.bf16.mxu0 0
    %503 = vmatpush1.bf16.msra.mxu0 0
    %504 = vmatprep.subr.bf16.mxu0 0
    %505 = vmatpush1.bf16.msra.mxu0 0
    %506 = vmatprep.subr.bf16.mxu0 0
    %507 = vmatpush1.bf16.msra.mxu0 0
    %508 = vmatprep.subr.bf16.mxu0 0
    %509 = vmatpush1.bf16.msra.mxu0 0
    %510 = vmatprep.subr.bf16.mxu0 0
    %511 = vmatpush1.bf16.msra.mxu0 0
    %512 = vmatprep.mubr.bf16.mxu0 0
    %513 = vmatmul.mubr.bf16.gmra.mrb[0].mxu0 %v478
    %v514 = vpop.f32.mrb[0].mxu0
    %v515 = vadd.f32 0.0, %v514
    %v516 = vpop.f32.mrb[0].mxu0
    %v517 = vadd.f32 0.0, %v516
    %v518 = vpop.f32.mrb[0].mxu0
    %v519 = vpop.f32.mrb[0].mxu0
    %520 = vdwg.mxu0
    %v523 = vrot.slane %v515, 4
    %v524 = vrot.slane %v517, 4
    %v527 = vadd.f32 %v471, %v523
    %v528 = vadd.f32 %v472, %v524
    %v529 = vxor.u32 %v527, 2147483648
    %v530 = vxor.u32 %v528, 2147483648
    %v531 = vmul.f32 %v529, 1.442695
    %v532 = vpow.pop %v531
    %v533 = vmul.f32 %v530, 1.442695
    %v534 = vpow.pop %v533
    %v535 = vadd.f32 %v532, 1.0
    %v536 = vadd.f32 %v534, 1.0
    %v537 = vrcp.pop %v535
    %v538 = vmul.f32 1.0, %v537
    %v539 = vrcp.pop %v536
    %v540 = vmul.f32 1.0, %v539
    %v541 = vmul.f32 %v538, %v339
    %v542 = vmul.f32 %v540, %v343
    %v543 = vadd.f32 %v541, %v352
    %v544 = vadd.f32 %v542, %v356
    %v546 = vrot.slane %v460, 6
    %v548 = vmul.f32 %v543, %v546
    %v549 = vmul.f32 %v543, %v544
    %551 = vrot.lane.b32.xlu0 %v549, 64
    %v552 = vpop.permute.xlu0 %551
    %v554 = vadd.f32 %v548, %v552
    %v555 = vtanh.pop %v554
    %v556 = vmul.f32 %v544, %v555
    %v557 = vpack.c.bf16 %v556, %v556
    %559 = vrot.lane.b32.xlu0 %v556, 64
    %v560 = vpop.permute.xlu0 %559
    %vm562 = vcmask 521220
    %563 = vst.msk [vmem:[#allocation3] sm:$0x30] %vm562, %v560
    %564 = vst.msk [vmem:[#allocation4 + $0x6] sm:$0x30] %vm562, %v560
    %v565 = vld [vmem:[#allocation2] sm:$0xc0]
    %v566 = vld [vmem:[#allocation2 + $0x8] sm:$0xc0]
    %v568 = vrot.slane %v557, 2
    %569 = vrot.lane.b32.xlu0 %v568, 64
    %v570 = vpop.permute.xlu0 %569
    %v572 = vsel %vm176, %v570, 0
    %574 = vmatprep.subr.bf16.mxu0 %v262
    %575 = vmatpush1.bf16.msra.mxu0 %v261
    %576 = vmatprep.subr.bf16.mxu0 %v264
    %577 = vmatpush1.bf16.msra.mxu0 %v263
    %578 = vmatprep.subr.bf16.mxu0 %v266
    %579 = vmatpush1.bf16.msra.mxu0 %v265
    %580 = vmatprep.subr.bf16.mxu0 %v268
    %581 = vmatpush1.bf16.msra.mxu0 %v267
    %582 = vmatprep.subr.bf16.mxu0 0
    %583 = vmatpush1.bf16.msra.mxu0 0
    %584 = vmatprep.subr.bf16.mxu0 0
    %585 = vmatpush1.bf16.msra.mxu0 0
    %586 = vmatprep.subr.bf16.mxu0 0
    %587 = vmatpush1.bf16.msra.mxu0 0
    %588 = vmatprep.subr.bf16.mxu0 0
    %589 = vmatpush1.bf16.msra.mxu0 0
    %590 = vmatprep.subr.bf16.mxu0 0
    %591 = vmatpush1.bf16.msra.mxu0 0
    %592 = vmatprep.subr.bf16.mxu0 0
    %593 = vmatpush1.bf16.msra.mxu0 0
    %594 = vmatprep.subr.bf16.mxu0 0
    %595 = vmatpush1.bf16.msra.mxu0 0
    %596 = vmatprep.subr.bf16.mxu0 0
    %597 = vmatpush1.bf16.msra.mxu0 0
    %598 = vmatprep.subr.bf16.mxu0 0
    %599 = vmatpush1.bf16.msra.mxu0 0
    %600 = vmatprep.subr.bf16.mxu0 0
    %601 = vmatpush1.bf16.msra.mxu0 0
    %602 = vmatprep.subr.bf16.mxu0 0
    %603 = vmatpush1.bf16.msra.mxu0 0
    %604 = vmatprep.subr.bf16.mxu0 0
    %605 = vmatpush1.bf16.msra.mxu0 0
    %606 = vmatprep.mubr.bf16.mxu0 0
    %607 = vmatmul.mubr.bf16.gmra.mrb[0].mxu0 %v572
    %v608 = vpop.f32.mrb[0].mxu0
    %v609 = vadd.f32 0.0, %v608
    %v610 = vpop.f32.mrb[0].mxu0
    %v611 = vadd.f32 0.0, %v610
    %v612 = vpop.f32.mrb[0].mxu0
    %v613 = vpop.f32.mrb[0].mxu0
    %614 = vdwg.mxu0
    %v617 = vrot.slane %v609, 2
    %v618 = vrot.slane %v611, 2
    %v621 = vadd.f32 %v565, %v617
    %v622 = vadd.f32 %v566, %v618
    %v623 = vxor.u32 %v621, 2147483648
    %v624 = vxor.u32 %v622, 2147483648
    %v625 = vmul.f32 %v623, 1.442695
    %v626 = vpow.pop %v625
    %v627 = vmul.f32 %v624, 1.442695
    %v628 = vpow.pop %v627
    %v629 = vadd.f32 %v626, 1.0
    %v630 = vadd.f32 %v628, 1.0
    %v631 = vrcp.pop %v629
    %v632 = vmul.f32 1.0, %v631
    %v633 = vrcp.pop %v630
    %v634 = vmul.f32 1.0, %v633
    %v635 = vmul.f32 %v632, %v339
    %v636 = vmul.f32 %v634, %v343
    %v637 = vadd.f32 %v635, %v352
    %v638 = vadd.f32 %v636, %v356
    %v640 = vrot.slane %v554, 6
    %v642 = vmul.f32 %v637, %v640
    %v643 = vmul.f32 %v637, %v638
    %645 = vrot.lane.b32.xlu0 %v643, 64
    %v646 = vpop.permute.xlu0 %645
    %v648 = vadd.f32 %v642, %v646
    %v649 = vtanh.pop %v648
    %v650 = vmul.f32 %v638, %v649
    %v651 = vpack.c.bf16 %v650, %v650
    %653 = vrot.lane.b32.xlu0 %v650, 64
    %v654 = vpop.permute.xlu0 %653
    %vm656 = vcmask 523270
    %657 = vst.msk [vmem:[#allocation3] sm:$0xc0] %vm656, %v654
    %658 = vst.msk [vmem:[#allocation4 + $0x2] sm:$0xc0] %vm656, %v654
    %v659 = vld [vmem:[#allocation2 + $0x10] sm:$0x3]
    %v660 = vld [vmem:[#allocation2 + $0x18] sm:$0x3]
    %v662 = vrot.slane %v651, 3
    %663 = vrot.lane.b32.xlu0 %v662, 64
    %v664 = vpop.permute.xlu0 %663
    %v666 = vsel %vm176, %v664, 0
    %668 = vmatprep.subr.bf16.mxu0 %v262
    %669 = vmatpush1.bf16.msra.mxu0 %v261
    %670 = vmatprep.subr.bf16.mxu0 %v264
    %671 = vmatpush1.bf16.msra.mxu0 %v263
    %672 = vmatprep.subr.bf16.mxu0 %v266
    %673 = vmatpush1.bf16.msra.mxu0 %v265
    %674 = vmatprep.subr.bf16.mxu0 %v268
    %675 = vmatpush1.bf16.msra.mxu0 %v267
    %676 = vmatprep.subr.bf16.mxu0 0
    %677 = vmatpush1.bf16.msra.mxu0 0
    %678 = vmatprep.subr.bf16.mxu0 0
    %679 = vmatpush1.bf16.msra.mxu0 0
    %680 = vmatprep.subr.bf16.mxu0 0
    %681 = vmatpush1.bf16.msra.mxu0 0
    %682 = vmatprep.subr.bf16.mxu0 0
    %683 = vmatpush1.bf16.msra.mxu0 0
    %684 = vmatprep.subr.bf16.mxu0 0
    %685 = vmatpush1.bf16.msra.mxu0 0
    %686 = vmatprep.subr.bf16.mxu0 0
    %687 = vmatpush1.bf16.msra.mxu0 0
    %688 = vmatprep.subr.bf16.mxu0 0
    %689 = vmatpush1.bf16.msra.mxu0 0
    %690 = vmatprep.subr.bf16.mxu0 0
    %691 = vmatpush1.bf16.msra.mxu0 0
    %692 = vmatprep.subr.bf16.mxu0 0
    %693 = vmatpush1.bf16.msra.mxu0 0
    %694 = vmatprep.subr.bf16.mxu0 0
    %695 = vmatpush1.bf16.msra.mxu0 0
    %696 = vmatprep.subr.bf16.mxu0 0
    %697 = vmatpush1.bf16.msra.mxu0 0
    %698 = vmatprep.subr.bf16.mxu0 0
    %699 = vmatpush1.bf16.msra.mxu0 0
    %700 = vmatprep.mubr.bf16.mxu0 0
    %701 = vmatmul.mubr.bf16.gmra.mrb[0].mxu0 %v666
    %v702 = vpop.f32.mrb[0].mxu0
    %v703 = vadd.f32 0.0, %v702
    %v704 = vpop.f32.mrb[0].mxu0
    %v705 = vadd.f32 0.0, %v704
    %v706 = vpop.f32.mrb[0].mxu0
    %v707 = vpop.f32.mrb[0].mxu0
    %708 = vdwg.mxu0
    %v709 = vadd.f32 %v659, %v703
    %v710 = vadd.f32 %v660, %v705
    %v711 = vxor.u32 %v709, 2147483648
    %v712 = vxor.u32 %v710, 2147483648
    %v713 = vmul.f32 %v711, 1.442695
    %v714 = vpow.pop %v713
    %v715 = vmul.f32 %v712, 1.442695
    %v716 = vpow.pop %v715
    %v717 = vadd.f32 %v714, 1.0
    %v718 = vadd.f32 %v716, 1.0
    %v719 = vrcp.pop %v717
    %v720 = vmul.f32 1.0, %v719
    %v721 = vrcp.pop %v718
    %v722 = vmul.f32 1.0, %v721
    %v723 = vmul.f32 %v720, %v339
    %v724 = vmul.f32 %v722, %v343
    %v725 = vadd.f32 %v723, %v352
    %v726 = vadd.f32 %v724, %v356
    %v728 = vrot.slane %v648, 6
    %v730 = vmul.f32 %v725, %v728
    %v731 = vmul.f32 %v725, %v726
    %733 = vrot.lane.b32.xlu0 %v731, 64
    %v734 = vpop.permute.xlu0 %733
    %v736 = vadd.f32 %v730, %v734
    %v737 = vtanh.pop %v736
    %v738 = vmul.f32 %v726, %v737
    %v739 = vpack.c.bf16 %v738, %v738
    %741 = vrot.lane.b32.xlu0 %v738, 64
    %v742 = vpop.permute.xlu0 %741
    %744 = vst.msk [vmem:[#allocation3 + $0x8] sm:$0x3] %vm375, %v742
    %745 = vst.msk [vmem:[#allocation4 + $0x6] sm:$0x3] %vm375, %v742
    %v746 = vld [vmem:[#allocation2 + $0x10] sm:$0xc]
    %v747 = vld [vmem:[#allocation2 + $0x18] sm:$0xc]
    %749 = vrot.lane.b32.xlu0 %v739, 64
    %v750 = vpop.permute.xlu0 %749
    %v752 = vsel %vm176, %v750, 0
    %754 = vmatprep.subr.bf16.mxu0 %v262
    %755 = vmatpush1.bf16.msra.mxu0 %v261
    %756 = vmatprep.subr.bf16.mxu0 %v264
    %757 = vmatpush1.bf16.msra.mxu0 %v263
    %758 = vmatprep.subr.bf16.mxu0 %v266
    %759 = vmatpush1.bf16.msra.mxu0 %v265
    %760 = vmatprep.subr.bf16.mxu0 %v268
    %761 = vmatpush1.bf16.msra.mxu0 %v267
    %762 = vmatprep.subr.bf16.mxu0 0
    %763 = vmatpush1.bf16.msra.mxu0 0
    %764 = vmatprep.subr.bf16.mxu0 0
    %765 = vmatpush1.bf16.msra.mxu0 0
    %766 = vmatprep.subr.bf16.mxu0 0
    %767 = vmatpush1.bf16.msra.mxu0 0
    %768 = vmatprep.subr.bf16.mxu0 0
    %769 = vmatpush1.bf16.msra.mxu0 0
    %770 = vmatprep.subr.bf16.mxu0 0
    %771 = vmatpush1.bf16.msra.mxu0 0
    %772 = vmatprep.subr.bf16.mxu0 0
    %773 = vmatpush1.bf16.msra.mxu0 0
    %774 = vmatprep.subr.bf16.mxu0 0
    %775 = vmatpush1.bf16.msra.mxu0 0
    %776 = vmatprep.subr.bf16.mxu0 0
    %777 = vmatpush1.bf16.msra.mxu0 0
    %778 = vmatprep.subr.bf16.mxu0 0
    %779 = vmatpush1.bf16.msra.mxu0 0
    %780 = vmatprep.subr.bf16.mxu0 0
    %781 = vmatpush1.bf16.msra.mxu0 0
    %782 = vmatprep.subr.bf16.mxu0 0
    %783 = vmatpush1.bf16.msra.mxu0 0
    %784 = vmatprep.subr.bf16.mxu0 0
    %785 = vmatpush1.bf16.msra.mxu0 0
    %786 = vmatprep.mubr.bf16.mxu0 0
    %787 = vmatmul.mubr.bf16.gmra.mrb[0].mxu0 %v752
    %v788 = vpop.f32.mrb[0].mxu0
    %v789 = vadd.f32 0.0, %v788
    %v790 = vpop.f32.mrb[0].mxu0
    %v791 = vadd.f32 0.0, %v790
    %v792 = vpop.f32.mrb[0].mxu0
    %v793 = vpop.f32.mrb[0].mxu0
    %794 = vdwg.mxu0
    %v797 = vrot.slane %v789, 6
    %v798 = vrot.slane %v791, 6
    %v801 = vadd.f32 %v746, %v797
    %v802 = vadd.f32 %v747, %v798
    %v803 = vxor.u32 %v801, 2147483648
    %v804 = vxor.u32 %v802, 2147483648
    %v805 = vmul.f32 %v803, 1.442695
    %v806 = vpow.pop %v805
    %v807 = vmul.f32 %v804, 1.442695
    %v808 = vpow.pop %v807
    %v809 = vadd.f32 %v806, 1.0
    %v810 = vadd.f32 %v808, 1.0
    %v811 = vrcp.pop %v809
    %v812 = vmul.f32 1.0, %v811
    %v813 = vrcp.pop %v810
    %v814 = vmul.f32 1.0, %v813
    %v815 = vmul.f32 %v812, %v339
    %v816 = vmul.f32 %v814, %v343
    %v817 = vadd.f32 %v815, %v352
    %v818 = vadd.f32 %v816, %v356
    %v820 = vrot.slane %v736, 6
    %v822 = vmul.f32 %v817, %v820
    %v823 = vmul.f32 %v817, %v818
    %825 = vrot.lane.b32.xlu0 %v823, 64
    %v826 = vpop.permute.xlu0 %825
    %v828 = vadd.f32 %v822, %v826
    %v829 = vtanh.pop %v828
    %v830 = vmul.f32 %v818, %v829
    %v831 = vpack.c.bf16 %v830, %v830
    %833 = vrot.lane.b32.xlu0 %v830, 64
    %v834 = vpop.permute.xlu0 %833
    %836 = vst.msk [vmem:[#allocation3 + $0x8] sm:$0xc] %vm468, %v834
    %837 = vst.msk [vmem:[#allocation4 + $0x2] sm:$0xc] %vm468, %v834
    %v838 = vld [vmem:[#allocation2 + $0x10] sm:$0x30]
    %v839 = vld [vmem:[#allocation2 + $0x18] sm:$0x30]
    %v841 = vrot.slane %v831, 1
    %842 = vrot.lane.b32.xlu0 %v841, 64
    %v843 = vpop.permute.xlu0 %842
    %v845 = vsel %vm176, %v843, 0
    %847 = vmatprep.subr.bf16.mxu0 %v262
    %848 = vmatpush1.bf16.msra.mxu0 %v261
    %849 = vmatprep.subr.bf16.mxu0 %v264
    %850 = vmatpush1.bf16.msra.mxu0 %v263
    %851 = vmatprep.subr.bf16.mxu0 %v266
    %852 = vmatpush1.bf16.msra.mxu0 %v265
    %853 = vmatprep.subr.bf16.mxu0 %v268
    %854 = vmatpush1.bf16.msra.mxu0 %v267
    %855 = vmatprep.subr.bf16.mxu0 0
    %856 = vmatpush1.bf16.msra.mxu0 0
    %857 = vmatprep.subr.bf16.mxu0 0
    %858 = vmatpush1.bf16.msra.mxu0 0
    %859 = vmatprep.subr.bf16.mxu0 0
    %860 = vmatpush1.bf16.msra.mxu0 0
    %861 = vmatprep.subr.bf16.mxu0 0
    %862 = vmatpush1.bf16.msra.mxu0 0
    %863 = vmatprep.subr.bf16.mxu0 0
    %864 = vmatpush1.bf16.msra.mxu0 0
    %865 = vmatprep.subr.bf16.mxu0 0
    %866 = vmatpush1.bf16.msra.mxu0 0
    %867 = vmatprep.subr.bf16.mxu0 0
    %868 = vmatpush1.bf16.msra.mxu0 0
    %869 = vmatprep.subr.bf16.mxu0 0
    %870 = vmatpush1.bf16.msra.mxu0 0
    %871 = vmatprep.subr.bf16.mxu0 0
    %872 = vmatpush1.bf16.msra.mxu0 0
    %873 = vmatprep.subr.bf16.mxu0 0
    %874 = vmatpush1.bf16.msra.mxu0 0
    %875 = vmatprep.subr.bf16.mxu0 0
    %876 = vmatpush1.bf16.msra.mxu0 0
    %877 = vmatprep.subr.bf16.mxu0 0
    %878 = vmatpush1.bf16.msra.mxu0 0
    %879 = vmatprep.mubr.bf16.mxu0 0
    %880 = vmatmul.mubr.bf16.gmra.mrb[0].mxu0 %v845
    %v881 = vpop.f32.mrb[0].mxu0
    %v882 = vadd.f32 0.0, %v881
    %v883 = vpop.f32.mrb[0].mxu0
    %v884 = vadd.f32 0.0, %v883
    %v885 = vpop.f32.mrb[0].mxu0
    %v886 = vpop.f32.mrb[0].mxu0
    %887 = vdwg.mxu0
    %v890 = vrot.slane %v882, 4
    %v891 = vrot.slane %v884, 4
    %v894 = vadd.f32 %v838, %v890
    %v895 = vadd.f32 %v839, %v891
    %v896 = vxor.u32 %v894, 2147483648
    %v897 = vxor.u32 %v895, 2147483648
    %v898 = vmul.f32 %v896, 1.442695
    %v899 = vpow.pop %v898
    %v900 = vmul.f32 %v897, 1.442695
    %v901 = vpow.pop %v900
    %v902 = vadd.f32 %v899, 1.0
    %v903 = vadd.f32 %v901, 1.0
    %v904 = vrcp.pop %v902
    %v905 = vmul.f32 1.0, %v904
    %v906 = vrcp.pop %v903
    %v907 = vmul.f32 1.0, %v906
    %v908 = vmul.f32 %v905, %v339
    %v909 = vmul.f32 %v907, %v343
    %v910 = vadd.f32 %v908, %v352
    %v911 = vadd.f32 %v909, %v356
    %v913 = vrot.slane %v828, 6
    %v915 = vmul.f32 %v910, %v913
    %v916 = vmul.f32 %v910, %v911
    %918 = vrot.lane.b32.xlu0 %v916, 64
    %v919 = vpop.permute.xlu0 %918
    %v921 = vadd.f32 %v915, %v919
    %v922 = vtanh.pop %v921
    %v923 = vmul.f32 %v911, %v922
    %v924 = vpack.c.bf16 %v923, %v923
    %926 = vrot.lane.b32.xlu0 %v923, 64
    %v927 = vpop.permute.xlu0 %926
    %929 = vst.msk [vmem:[#allocation3 + $0x8] sm:$0x30] %vm562, %v927
    %930 = vst.msk [vmem:[#allocation4 - $0x2] sm:$0x30] %vm562, %v927
    %v931 = vld [vmem:[#allocation2 + $0x10] sm:$0xc0]
    %v932 = vld [vmem:[#allocation2 + $0x18] sm:$0xc0]
    %v934 = vrot.slane %v924, 2
    %935 = vrot.lane.b32.xlu0 %v934, 64
    %v936 = vpop.permute.xlu0 %935
    %v938 = vsel %vm176, %v936, 0
    %940 = vmatprep.subr.bf16.mxu0 %v262
    %941 = vmatpush1.bf16.msra.mxu0 %v261
    %942 = vmatprep.subr.bf16.mxu0 %v264
    %943 = vmatpush1.bf16.msra.mxu0 %v263
    %944 = vmatprep.subr.bf16.mxu0 %v266
    %945 = vmatpush1.bf16.msra.mxu0 %v265
    %946 = vmatprep.subr.bf16.mxu0 %v268
    %947 = vmatpush1.bf16.msra.mxu0 %v267
    %948 = vmatprep.subr.bf16.mxu0 0
    %949 = vmatpush1.bf16.msra.mxu0 0
    %950 = vmatprep.subr.bf16.mxu0 0
    %951 = vmatpush1.bf16.msra.mxu0 0
    %952 = vmatprep.subr.bf16.mxu0 0
    %953 = vmatpush1.bf16.msra.mxu0 0
    %954 = vmatprep.subr.bf16.mxu0 0
    %955 = vmatpush1.bf16.msra.mxu0 0
    %956 = vmatprep.subr.bf16.mxu0 0
    %957 = vmatpush1.bf16.msra.mxu0 0
    %958 = vmatprep.subr.bf16.mxu0 0
    %959 = vmatpush1.bf16.msra.mxu0 0
    %960 = vmatprep.subr.bf16.mxu0 0
    %961 = vmatpush1.bf16.msra.mxu0 0
    %962 = vmatprep.subr.bf16.mxu0 0
    %963 = vmatpush1.bf16.msra.mxu0 0
    %964 = vmatprep.subr.bf16.mxu0 0
    %965 = vmatpush1.bf16.msra.mxu0 0
    %966 = vmatprep.subr.bf16.mxu0 0
    %967 = vmatpush1.bf16.msra.mxu0 0
    %968 = vmatprep.subr.bf16.mxu0 0
    %969 = vmatpush1.bf16.msra.mxu0 0
    %970 = vmatprep.subr.bf16.mxu0 0
    %971 = vmatpush1.bf16.msra.mxu0 0
    %972 = vmatprep.mubr.bf16.mxu0 0
    %973 = vmatmul.mubr.bf16.gmra.mrb[0].mxu0 %v938
    %v974 = vpop.f32.mrb[0].mxu0
    %v975 = vadd.f32 0.0, %v974
    %v976 = vpop.f32.mrb[0].mxu0
    %v977 = vadd.f32 0.0, %v976
    %v978 = vpop.f32.mrb[0].mxu0
    %v979 = vpop.f32.mrb[0].mxu0
    %980 = vdwg.mxu0
    %v983 = vrot.slane %v975, 2
    %v984 = vrot.slane %v977, 2
    %v987 = vadd.f32 %v931, %v983
    %v988 = vadd.f32 %v932, %v984
    %v989 = vxor.u32 %v987, 2147483648
    %v990 = vxor.u32 %v988, 2147483648
    %v991 = vmul.f32 %v989, 1.442695
    %v992 = vpow.pop %v991
    %v993 = vmul.f32 %v990, 1.442695
    %v994 = vpow.pop %v993
    %v995 = vadd.f32 %v992, 1.0
    %v996 = vadd.f32 %v994, 1.0
    %v997 = vrcp.pop %v995
    %v998 = vmul.f32 1.0, %v997
    %v999 = vrcp.pop %v996
    %v1000 = vmul.f32 1.0, %v999
    %v1001 = vmul.f32 %v998, %v339
    %v1002 = vmul.f32 %v1000, %v343
    %v1003 = vadd.f32 %v1001, %v352
    %v1004 = vadd.f32 %v1002, %v356
    %v1006 = vrot.slane %v921, 6
    %v1008 = vmul.f32 %v1003, %v1006
    %v1009 = vmul.f32 %v1003, %v1004
    %1011 = vrot.lane.b32.xlu0 %v1009, 64
    %v1012 = vpop.permute.xlu0 %1011
    %v1014 = vadd.f32 %v1008, %v1012
    %v1015 = vtanh.pop %v1014
    %v1016 = vmul.f32 %v1004, %v1015
    %1018 = vrot.lane.b32.xlu0 %v1016, 64
    %v1019 = vpop.permute.xlu0 %1018
    %1021 = vst.msk [vmem:[#allocation3 + $0x8] sm:$0xc0] %vm656, %v1019
    %1022 = vst.msk [vmem:[#allocation4 - $0x6] sm:$0xc0] %vm656, %v1019
    %v1023 = vld [vmem:[#allocation3] sm:$0xff]
    %v1024 = vld [vmem:[#allocation3 + $0x8] sm:$0xff]
    %v1025 = vpack.c.bf16 %v1024, %v1023
    %v1026 = vld [vmem:[#allocation8] sm:$0xff]
    %v1027 = vld [vmem:[#allocation8 + $0x8] sm:$0xff]
    %v1028 = vld [vmem:[#allocation8 + $0x10] sm:$0xff]
    %v1029 = vld [vmem:[#allocation8 + $0x18] sm:$0xff]
    %v1030 = vld [vmem:[#allocation8 + $0x20] sm:$0xff]
    %v1031 = vld [vmem:[#allocation8 + $0x28] sm:$0xff]
    %v1032 = vld [vmem:[#allocation8 + $0x30] sm:$0xff]
    %v1033 = vld [vmem:[#allocation8 + $0x38] sm:$0xff]
    %v1034 = vld [vmem:[#allocation4] sm:$0xff]
    %v1035 = vld [vmem:[#allocation4 + $0x8] sm:$0xff]
    %v1036 = vpack.c.bf16 %v1035, %v1034
    %v1037 = vld [vmem:[#allocation10] sm:$0xff]
    %v1038 = vld [vmem:[#allocation10 + $0x8] sm:$0xff]
    %v1039 = vld [vmem:[#allocation10 + $0x10] sm:$0xff]
    %v1040 = vld [vmem:[#allocation10 + $0x18] sm:$0xff]
    %v1041 = vld [vmem:[#allocation10 + $0x20] sm:$0xff]
    %v1042 = vld [vmem:[#allocation10 + $0x28] sm:$0xff]
    %v1043 = vld [vmem:[#allocation10 + $0x30] sm:$0xff]
    %v1044 = vld [vmem:[#allocation10 + $0x38] sm:$0xff]
    %v1053 = vunpack.c.l.b16 %v1037
    %v1054 = vunpack.c.h.b16 %v1037
    %v1055 = vunpack.c.l.b16 %v1038
    %v1056 = vunpack.c.h.b16 %v1038
    %v1057 = vunpack.c.l.b16 %v1039
    %v1058 = vunpack.c.h.b16 %v1039
    %v1059 = vunpack.c.l.b16 %v1040
    %v1060 = vunpack.c.h.b16 %v1040
    %v1061 = vunpack.c.l.b16 %v1041
    %v1062 = vunpack.c.h.b16 %v1041
    %v1063 = vunpack.c.l.b16 %v1042
    %v1064 = vunpack.c.h.b16 %v1042
    %v1065 = vunpack.c.l.b16 %v1043
    %v1066 = vunpack.c.h.b16 %v1043
    %v1067 = vunpack.c.l.b16 %v1044
    %v1068 = vunpack.c.h.b16 %v1044
    %v1069 = vpack.c.b16 %v1055, %v1053
    %v1070 = vpack.c.b16 %v1056, %v1054
    %v1071 = vpack.c.b16 %v1059, %v1057
    %v1072 = vpack.c.b16 %v1060, %v1058
    %v1073 = vpack.c.b16 %v1063, %v1061
    %v1074 = vpack.c.b16 %v1064, %v1062
    %v1075 = vpack.c.b16 %v1067, %v1065
    %v1076 = vpack.c.b16 %v1068, %v1066
    %v1086 = vsel %vm176, %v1036, 0
    %1088 = vmatprep.subr.bf16.mxu0 %v1070
    %1089 = vmatpush1.bf16.msra.mxu0 %v1069
    %1090 = vmatprep.subr.bf16.mxu0 %v1072
    %1091 = vmatpush1.bf16.msra.mxu0 %v1071
    %1092 = vmatprep.subr.bf16.mxu0 %v1074
    %1093 = vmatpush1.bf16.msra.mxu0 %v1073
    %1094 = vmatprep.subr.bf16.mxu0 %v1076
    %1095 = vmatpush1.bf16.msra.mxu0 %v1075
    %1096 = vmatprep.subr.bf16.mxu0 0
    %1097 = vmatpush1.bf16.msra.mxu0 0
    %1098 = vmatprep.subr.bf16.mxu0 0
    %1099 = vmatpush1.bf16.msra.mxu0 0
    %1100 = vmatprep.subr.bf16.mxu0 0
    %1101 = vmatpush1.bf16.msra.mxu0 0
    %1102 = vmatprep.subr.bf16.mxu0 0
    %1103 = vmatpush1.bf16.msra.mxu0 0
    %1104 = vmatprep.subr.bf16.mxu0 0
    %1105 = vmatpush1.bf16.msra.mxu0 0
    %1106 = vmatprep.subr.bf16.mxu0 0
    %1107 = vmatpush1.bf16.msra.mxu0 0
    %1108 = vmatprep.subr.bf16.mxu0 0
    %1109 = vmatpush1.bf16.msra.mxu0 0
    %1110 = vmatprep.subr.bf16.mxu0 0
    %1111 = vmatpush1.bf16.msra.mxu0 0
    %1112 = vmatprep.subr.bf16.mxu0 0
    %1113 = vmatpush1.bf16.msra.mxu0 0
    %1114 = vmatprep.subr.bf16.mxu0 0
    %1115 = vmatpush1.bf16.msra.mxu0 0
    %1116 = vmatprep.subr.bf16.mxu0 0
    %1117 = vmatpush1.bf16.msra.mxu0 0
    %1118 = vmatprep.subr.bf16.mxu0 0
    %1119 = vmatpush1.bf16.msra.mxu0 0
    %1120 = vmatprep.mubr.bf16.mxu0 0
    %1121 = vmatmul.mubr.bf16.gmra.mrb[0].mxu0 %v1086
    %v1122 = vpop.f32.mrb[0].mxu0
    %v1123 = vadd.f32 0.0, %v1122
    %v1124 = vpop.f32.mrb[0].mxu0
    %v1125 = vadd.f32 0.0, %v1124
    %v1126 = vpop.f32.mrb[0].mxu0
    %v1127 = vadd.f32 0.0, %v1126
    %v1128 = vpop.f32.mrb[0].mxu0
    %v1129 = vadd.f32 0.0, %v1128
    %1130 = vdwg.mxu0
    %v1139 = vunpack.c.l.b16 %v1026
    %v1140 = vunpack.c.h.b16 %v1026
    %v1141 = vunpack.c.l.b16 %v1027
    %v1142 = vunpack.c.h.b16 %v1027
    %v1143 = vunpack.c.l.b16 %v1028
    %v1144 = vunpack.c.h.b16 %v1028
    %v1145 = vunpack.c.l.b16 %v1029
    %v1146 = vunpack.c.h.b16 %v1029
    %v1147 = vunpack.c.l.b16 %v1030
    %v1148 = vunpack.c.h.b16 %v1030
    %v1149 = vunpack.c.l.b16 %v1031
    %v1150 = vunpack.c.h.b16 %v1031
    %v1151 = vunpack.c.l.b16 %v1032
    %v1152 = vunpack.c.h.b16 %v1032
    %v1153 = vunpack.c.l.b16 %v1033
    %v1154 = vunpack.c.h.b16 %v1033
    %v1155 = vpack.c.b16 %v1141, %v1139
    %v1156 = vpack.c.b16 %v1142, %v1140
    %v1157 = vpack.c.b16 %v1145, %v1143
    %v1158 = vpack.c.b16 %v1146, %v1144
    %v1159 = vpack.c.b16 %v1149, %v1147
    %v1160 = vpack.c.b16 %v1150, %v1148
    %v1161 = vpack.c.b16 %v1153, %v1151
    %v1162 = vpack.c.b16 %v1154, %v1152
    %v1172 = vsel %vm176, %v1025, 0
    %1174 = vmatprep.subr.bf16.mxu0 %v1156
    %1175 = vmatpush1.bf16.msra.mxu0 %v1155
    %1176 = vmatprep.subr.bf16.mxu0 %v1158
    %1177 = vmatpush1.bf16.msra.mxu0 %v1157
    %1178 = vmatprep.subr.bf16.mxu0 %v1160
    %1179 = vmatpush1.bf16.msra.mxu0 %v1159
    %1180 = vmatprep.subr.bf16.mxu0 %v1162
    %1181 = vmatpush1.bf16.msra.mxu0 %v1161
    %1182 = vmatprep.subr.bf16.mxu0 0
    %1183 = vmatpush1.bf16.msra.mxu0 0
    %1184 = vmatprep.subr.bf16.mxu0 0
    %1185 = vmatpush1.bf16.msra.mxu0 0
    %1186 = vmatprep.subr.bf16.mxu0 0
    %1187 = vmatpush1.bf16.msra.mxu0 0
    %1188 = vmatprep.subr.bf16.mxu0 0
    %1189 = vmatpush1.bf16.msra.mxu0 0
    %1190 = vmatprep.subr.bf16.mxu0 0
    %1191 = vmatpush1.bf16.msra.mxu0 0
    %1192 = vmatprep.subr.bf16.mxu0 0
    %1193 = vmatpush1.bf16.msra.mxu0 0
    %1194 = vmatprep.subr.bf16.mxu0 0
    %1195 = vmatpush1.bf16.msra.mxu0 0
    %1196 = vmatprep.subr.bf16.mxu0 0
    %1197 = vmatpush1.bf16.msra.mxu0 0
    %1198 = vmatprep.subr.bf16.mxu0 0
    %1199 = vmatpush1.bf16.msra.mxu0 0
    %1200 = vmatprep.subr.bf16.mxu0 0
    %1201 = vmatpush1.bf16.msra.mxu0 0
    %1202 = vmatprep.subr.bf16.mxu0 0
    %1203 = vmatpush1.bf16.msra.mxu0 0
    %1204 = vmatprep.subr.bf16.mxu0 0
    %1205 = vmatpush1.bf16.msra.mxu0 0
    %1206 = vmatprep.mubr.bf16.mxu0 0
    %1207 = vmatmul.mubr.bf16.gmra.mrb[0].mxu0 %v1172
    %v1208 = vpop.f32.mrb[0].mxu0
    %v1209 = vadd.f32 %v1123, %v1208
    %v1210 = vpop.f32.mrb[0].mxu0
    %v1211 = vadd.f32 %v1125, %v1210
    %v1212 = vpop.f32.mrb[0].mxu0
    %v1213 = vadd.f32 %v1127, %v1212
    %v1214 = vpop.f32.mrb[0].mxu0
    %v1215 = vadd.f32 %v1129, %v1214
    %1216 = vdwg.mxu0
    %v1217 = vld [vmem:[%s7] sm:$0x3]
    %v1219 = vlaneseq
    %v1220 = vshrl.u32 %v1219, 7
    %v1221 = vsub.s32 0, %v1220
    %v1222 = vrot.slane %v1217, %v1221
    %v1223 = vlaneseq
    %v1224 = vshrl.u32 %v1223, 7
    %v1225 = vsub.s32 1, %v1224
    %v1226 = vrot.slane %v1217, %v1225
    %v1229 = vadd.f32 %v1209, %v1222
    %v1230 = vadd.f32 %v1211, %v1226
    %v1231 = vadd.f32 %v1213, %v1222
    %v1232 = vadd.f32 %v1215, %v1226
    %1233 = vst [vmem:[#allocation2] sm:$0xff] %v1229
    %1234 = vst [vmem:[#allocation2 + $0x8] sm:$0xff] %v1230
    %1235 = vst [vmem:[#allocation2 + $0x10] sm:$0xff] %v1231
    %1236 = vst [vmem:[#allocation2 + $0x18] sm:$0xff] %v1232
    %v1237 = vld [vmem:[#allocation11] sm:$0xff]
    %v1238 = vld [vmem:[#allocation11 + $0x8] sm:$0xff]
    %v1239 = vld [vmem:[#allocation11 + $0x10] sm:$0xff]
    %v1240 = vld [vmem:[#allocation11 + $0x18] sm:$0xff]
    %v1241 = vld [vmem:[#allocation11 + $0x20] sm:$0xff]
    %v1242 = vld [vmem:[#allocation11 + $0x28] sm:$0xff]
    %v1243 = vld [vmem:[#allocation11 + $0x30] sm:$0xff]
    %v1244 = vld [vmem:[#allocation11 + $0x38] sm:$0xff]
    %v1245 = vld [vmem:[#allocation2] sm:$0x3]
    %v1246 = vld [vmem:[#allocation2 + $0x8] sm:$0x3]
    %v1255 = vunpack.c.l.b16 %v1237
    %v1256 = vunpack.c.h.b16 %v1237
    %v1257 = vunpack.c.l.b16 %v1238
    %v1258 = vunpack.c.h.b16 %v1238
    %v1259 = vunpack.c.l.b16 %v1239
    %v1260 = vunpack.c.h.b16 %v1239
    %v1261 = vunpack.c.l.b16 %v1240
    %v1262 = vunpack.c.h.b16 %v1240
    %v1263 = vunpack.c.l.b16 %v1241
    %v1264 = vunpack.c.h.b16 %v1241
    %v1265 = vunpack.c.l.b16 %v1242
    %v1266 = vunpack.c.h.b16 %v1242
    %v1267 = vunpack.c.l.b16 %v1243
    %v1268 = vunpack.c.h.b16 %v1243
    %v1269 = vunpack.c.l.b16 %v1244
    %v1270 = vunpack.c.h.b16 %v1244
    %v1271 = vpack.c.b16 %v1257, %v1255
    %v1272 = vpack.c.b16 %v1258, %v1256
    %v1273 = vpack.c.b16 %v1261, %v1259
    %v1274 = vpack.c.b16 %v1262, %v1260
    %v1275 = vpack.c.b16 %v1265, %v1263
    %v1276 = vpack.c.b16 %v1266, %v1264
    %v1277 = vpack.c.b16 %v1269, %v1267
    %v1278 = vpack.c.b16 %v1270, %v1268
    %1287 = vmatprep.subr.bf16.mxu0 %v1272
    %1288 = vmatpush1.bf16.msra.mxu0 %v1271
    %1289 = vmatprep.subr.bf16.mxu0 %v1274
    %1290 = vmatpush1.bf16.msra.mxu0 %v1273
    %1291 = vmatprep.subr.bf16.mxu0 %v1276
    %1292 = vmatpush1.bf16.msra.mxu0 %v1275
    %1293 = vmatprep.subr.bf16.mxu0 %v1278
    %1294 = vmatpush1.bf16.msra.mxu0 %v1277
    %1295 = vmatprep.subr.bf16.mxu0 0
    %1296 = vmatpush1.bf16.msra.mxu0 0
    %1297 = vmatprep.subr.bf16.mxu0 0
    %1298 = vmatpush1.bf16.msra.mxu0 0
    %1299 = vmatprep.subr.bf16.mxu0 0
    %1300 = vmatpush1.bf16.msra.mxu0 0
    %1301 = vmatprep.subr.bf16.mxu0 0
    %1302 = vmatpush1.bf16.msra.mxu0 0
    %1303 = vmatprep.subr.bf16.mxu0 0
    %1304 = vmatpush1.bf16.msra.mxu0 0
    %1305 = vmatprep.subr.bf16.mxu0 0
    %1306 = vmatpush1.bf16.msra.mxu0 0
    %1307 = vmatprep.subr.bf16.mxu0 0
    %1308 = vmatpush1.bf16.msra.mxu0 0
    %1309 = vmatprep.subr.bf16.mxu0 0
    %1310 = vmatpush1.bf16.msra.mxu0 0
    %1311 = vmatprep.subr.bf16.mxu0 0
    %1312 = vmatpush1.bf16.msra.mxu0 0
    %1313 = vmatprep.subr.bf16.mxu0 0
    %1314 = vmatpush1.bf16.msra.mxu0 0
    %1315 = vmatprep.subr.bf16.mxu0 0
    %1316 = vmatpush1.bf16.msra.mxu0 0
    %1317 = vmatprep.subr.bf16.mxu0 0
    %1318 = vmatpush1.bf16.msra.mxu0 0
    %1319 = vmatprep.mubr.bf16.mxu0 0
    %1320 = vmatmul.mubr.bf16.gmra.mrb[0].mxu0 %v278
    %v1321 = vpop.f32.mrb[0].mxu0
    %v1322 = vadd.f32 0.0, %v1321
    %v1323 = vpop.f32.mrb[0].mxu0
    %v1324 = vadd.f32 0.0, %v1323
    %v1325 = vpop.f32.mrb[0].mxu0
    %v1326 = vpop.f32.mrb[0].mxu0
    %1327 = vdwg.mxu0
    %v1328 = vadd.f32 %v1245, %v1322
    %v1329 = vadd.f32 %v1246, %v1324
    %v1330 = vxor.u32 %v1328, 2147483648
    %v1331 = vxor.u32 %v1329, 2147483648
    %v1332 = vmul.f32 %v1330, 1.442695
    %v1333 = vpow.pop %v1332
    %v1334 = vmul.f32 %v1331, 1.442695
    %v1335 = vpow.pop %v1334
    %v1336 = vadd.f32 %v1333, 1.0
    %v1337 = vadd.f32 %v1335, 1.0
    %v1338 = vrcp.pop %v1336
    %v1339 = vmul.f32 1.0, %v1338
    %v1340 = vrcp.pop %v1337
    %v1341 = vmul.f32 1.0, %v1340
    %v1342 = vmul.f32 %v1339, %v339
    %v1343 = vmul.f32 %v1341, %v343
    %v1344 = vadd.f32 %v1342, %v352
    %v1345 = vadd.f32 %v1343, %v356
    %v1346 = vmul.f32 %v1344, 0.0
    %v1347 = vmul.f32 %v1344, %v1345
    %1349 = vrot.lane.b32.xlu0 %v1347, 64
    %v1350 = vpop.permute.xlu0 %1349
    %v1352 = vadd.f32 %v1346, %v1350
    %v1353 = vtanh.pop %v1352
    %v1354 = vmul.f32 %v1345, %v1353
    %v1355 = vpack.c.bf16 %v1354, %v1354
    %v1356 = vld [vmem:[#allocation2] sm:$0xc]
    %v1357 = vld [vmem:[#allocation2 + $0x8] sm:$0xc]
    %1359 = vrot.lane.b32.xlu0 %v1355, 64
    %v1360 = vpop.permute.xlu0 %1359
    %v1362 = vsel %vm176, %v1360, 0
    %1364 = vmatprep.subr.bf16.mxu0 %v1272
    %1365 = vmatpush1.bf16.msra.mxu0 %v1271
    %1366 = vmatprep.subr.bf16.mxu0 %v1274
    %1367 = vmatpush1.bf16.msra.mxu0 %v1273
    %1368 = vmatprep.subr.bf16.mxu0 %v1276
    %1369 = vmatpush1.bf16.msra.mxu0 %v1275
    %1370 = vmatprep.subr.bf16.mxu0 %v1278
    %1371 = vmatpush1.bf16.msra.mxu0 %v1277
    %1372 = vmatprep.subr.bf16.mxu0 0
    %1373 = vmatpush1.bf16.msra.mxu0 0
    %1374 = vmatprep.subr.bf16.mxu0 0
    %1375 = vmatpush1.bf16.msra.mxu0 0
    %1376 = vmatprep.subr.bf16.mxu0 0
    %1377 = vmatpush1.bf16.msra.mxu0 0
    %1378 = vmatprep.subr.bf16.mxu0 0
    %1379 = vmatpush1.bf16.msra.mxu0 0
    %1380 = vmatprep.subr.bf16.mxu0 0
    %1381 = vmatpush1.bf16.msra.mxu0 0
    %1382 = vmatprep.subr.bf16.mxu0 0
    %1383 = vmatpush1.bf16.msra.mxu0 0
    %1384 = vmatprep.subr.bf16.mxu0 0
    %1385 = vmatpush1.bf16.msra.mxu0 0
    %1386 = vmatprep.subr.bf16.mxu0 0
    %1387 = vmatpush1.bf16.msra.mxu0 0
    %1388 = vmatprep.subr.bf16.mxu0 0
    %1389 = vmatpush1.bf16.msra.mxu0 0
    %1390 = vmatprep.subr.bf16.mxu0 0
    %1391 = vmatpush1.bf16.msra.mxu0 0
    %1392 = vmatprep.subr.bf16.mxu0 0
    %1393 = vmatpush1.bf16.msra.mxu0 0
    %1394 = vmatprep.subr.bf16.mxu0 0
    %1395 = vmatpush1.bf16.msra.mxu0 0
    %1396 = vmatprep.mubr.bf16.mxu0 0
    %1397 = vmatmul.mubr.bf16.gmra.mrb[0].mxu0 %v1362
    %v1398 = vpop.f32.mrb[0].mxu0
    %v1399 = vadd.f32 0.0, %v1398
    %v1400 = vpop.f32.mrb[0].mxu0
    %v1401 = vadd.f32 0.0, %v1400
    %v1402 = vpop.f32.mrb[0].mxu0
    %v1403 = vpop.f32.mrb[0].mxu0
    %1404 = vdwg.mxu0
    %v1407 = vrot.slane %v1399, 6
    %v1408 = vrot.slane %v1401, 6
    %v1411 = vadd.f32 %v1356, %v1407
    %v1412 = vadd.f32 %v1357, %v1408
    %v1413 = vxor.u32 %v1411, 2147483648
    %v1414 = vxor.u32 %v1412, 2147483648
    %v1415 = vmul.f32 %v1413, 1.442695
    %v1416 = vpow.pop %v1415
    %v1417 = vmul.f32 %v1414, 1.442695
    %v1418 = vpow.pop %v1417
    %v1419 = vadd.f32 %v1416, 1.0
    %v1420 = vadd.f32 %v1418, 1.0
    %v1421 = vrcp.pop %v1419
    %v1422 = vmul.f32 1.0, %v1421
    %v1423 = vrcp.pop %v1420
    %v1424 = vmul.f32 1.0, %v1423
    %v1425 = vmul.f32 %v1422, %v339
    %v1426 = vmul.f32 %v1424, %v343
    %v1427 = vadd.f32 %v1425, %v352
    %v1428 = vadd.f32 %v1426, %v356
    %v1430 = vrot.slane %v1352, 6
    %v1432 = vmul.f32 %v1427, %v1430
    %v1433 = vmul.f32 %v1427, %v1428
    %1435 = vrot.lane.b32.xlu0 %v1433, 64
    %v1436 = vpop.permute.xlu0 %1435
    %v1438 = vadd.f32 %v1432, %v1436
    %v1439 = vtanh.pop %v1438
    %v1440 = vmul.f32 %v1428, %v1439
    %v1441 = vpack.c.bf16 %v1440, %v1440
    %v1442 = vld [vmem:[#allocation2] sm:$0x30]
    %v1443 = vld [vmem:[#allocation2 + $0x8] sm:$0x30]
    %v1445 = vrot.slane %v1441, 1
    %1446 = vrot.lane.b32.xlu0 %v1445, 64
    %v1447 = vpop.permute.xlu0 %1446
    %v1449 = vsel %vm176, %v1447, 0
    %1451 = vmatprep.subr.bf16.mxu0 %v1272
    %1452 = vmatpush1.bf16.msra.mxu0 %v1271
    %1453 = vmatprep.subr.bf16.mxu0 %v1274
    %1454 = vmatpush1.bf16.msra.mxu0 %v1273
    %1455 = vmatprep.subr.bf16.mxu0 %v1276
    %1456 = vmatpush1.bf16.msra.mxu0 %v1275
    %1457 = vmatprep.subr.bf16.mxu0 %v1278
    %1458 = vmatpush1.bf16.msra.mxu0 %v1277
    %1459 = vmatprep.subr.bf16.mxu0 0
    %1460 = vmatpush1.bf16.msra.mxu0 0
    %1461 = vmatprep.subr.bf16.mxu0 0
    %1462 = vmatpush1.bf16.msra.mxu0 0
    %1463 = vmatprep.subr.bf16.mxu0 0
    %1464 = vmatpush1.bf16.msra.mxu0 0
    %1465 = vmatprep.subr.bf16.mxu0 0
    %1466 = vmatpush1.bf16.msra.mxu0 0
    %1467 = vmatprep.subr.bf16.mxu0 0
    %1468 = vmatpush1.bf16.msra.mxu0 0
    %1469 = vmatprep.subr.bf16.mxu0 0
    %1470 = vmatpush1.bf16.msra.mxu0 0
    %1471 = vmatprep.subr.bf16.mxu0 0
    %1472 = vmatpush1.bf16.msra.mxu0 0
    %1473 = vmatprep.subr.bf16.mxu0 0
    %1474 = vmatpush1.bf16.msra.mxu0 0
    %1475 = vmatprep.subr.bf16.mxu0 0
    %1476 = vmatpush1.bf16.msra.mxu0 0
    %1477 = vmatprep.subr.bf16.mxu0 0
    %1478 = vmatpush1.bf16.msra.mxu0 0
    %1479 = vmatprep.subr.bf16.mxu0 0
    %1480 = vmatpush1.bf16.msra.mxu0 0
    %1481 = vmatprep.subr.bf16.mxu0 0
    %1482 = vmatpush1.bf16.msra.mxu0 0
    %1483 = vmatprep.mubr.bf16.mxu0 0
    %1484 = vmatmul.mubr.bf16.gmra.mrb[0].mxu0 %v1449
    %v1485 = vpop.f32.mrb[0].mxu0
    %v1486 = vadd.f32 0.0, %v1485
    %v1487 = vpop.f32.mrb[0].mxu0
    %v1488 = vadd.f32 0.0, %v1487
    %v1489 = vpop.f32.mrb[0].mxu0
    %v1490 = vpop.f32.mrb[0].mxu0
    %1491 = vdwg.mxu0
    %v1494 = vrot.slane %v1486, 4
    %v1495 = vrot.slane %v1488, 4
    %v1498 = vadd.f32 %v1442, %v1494
    %v1499 = vadd.f32 %v1443, %v1495
    %v1500 = vxor.u32 %v1498, 2147483648
    %v1501 = vxor.u32 %v1499, 2147483648
    %v1502 = vmul.f32 %v1500, 1.442695
    %v1503 = vpow.pop %v1502
    %v1504 = vmul.f32 %v1501, 1.442695
    %v1505 = vpow.pop %v1504
    %v1506 = vadd.f32 %v1503, 1.0
    %v1507 = vadd.f32 %v1505, 1.0
    %v1508 = vrcp.pop %v1506
    %v1509 = vmul.f32 1.0, %v1508
    %v1510 = vrcp.pop %v1507
    %v1511 = vmul.f32 1.0, %v1510
    %v1512 = vmul.f32 %v1509, %v339
    %v1513 = vmul.f32 %v1511, %v343
    %v1514 = vadd.f32 %v1512, %v352
    %v1515 = vadd.f32 %v1513, %v356
    %v1517 = vrot.slane %v1438, 6
    %v1519 = vmul.f32 %v1514, %v1517
    %v1520 = vmul.f32 %v1514, %v1515
    %1522 = vrot.lane.b32.xlu0 %v1520, 64
    %v1523 = vpop.permute.xlu0 %1522
    %v1525 = vadd.f32 %v1519, %v1523
    %v1526 = vtanh.pop %v1525
    %v1527 = vmul.f32 %v1515, %v1526
    %v1528 = vpack.c.bf16 %v1527, %v1527
    %v1529 = vld [vmem:[#allocation2] sm:$0xc0]
    %v1530 = vld [vmem:[#allocation2 + $0x8] sm:$0xc0]
    %v1532 = vrot.slane %v1528, 2
    %1533 = vrot.lane.b32.xlu0 %v1532, 64
    %v1534 = vpop.permute.xlu0 %1533
    %v1536 = vsel %vm176, %v1534, 0
    %1538 = vmatprep.subr.bf16.mxu0 %v1272
    %1539 = vmatpush1.bf16.msra.mxu0 %v1271
    %1540 = vmatprep.subr.bf16.mxu0 %v1274
    %1541 = vmatpush1.bf16.msra.mxu0 %v1273
    %1542 = vmatprep.subr.bf16.mxu0 %v1276
    %1543 = vmatpush1.bf16.msra.mxu0 %v1275
    %1544 = vmatprep.subr.bf16.mxu0 %v1278
    %1545 = vmatpush1.bf16.msra.mxu0 %v1277
    %1546 = vmatprep.subr.bf16.mxu0 0
    %1547 = vmatpush1.bf16.msra.mxu0 0
    %1548 = vmatprep.subr.bf16.mxu0 0
    %1549 = vmatpush1.bf16.msra.mxu0 0
    %1550 = vmatprep.subr.bf16.mxu0 0
    %1551 = vmatpush1.bf16.msra.mxu0 0
    %1552 = vmatprep.subr.bf16.mxu0 0
    %1553 = vmatpush1.bf16.msra.mxu0 0
    %1554 = vmatprep.subr.bf16.mxu0 0
    %1555 = vmatpush1.bf16.msra.mxu0 0
    %1556 = vmatprep.subr.bf16.mxu0 0
    %1557 = vmatpush1.bf16.msra.mxu0 0
    %1558 = vmatprep.subr.bf16.mxu0 0
    %1559 = vmatpush1.bf16.msra.mxu0 0
    %1560 = vmatprep.subr.bf16.mxu0 0
    %1561 = vmatpush1.bf16.msra.mxu0 0
    %1562 = vmatprep.subr.bf16.mxu0 0
    %1563 = vmatpush1.bf16.msra.mxu0 0
    %1564 = vmatprep.subr.bf16.mxu0 0
    %1565 = vmatpush1.bf16.msra.mxu0 0
    %1566 = vmatprep.subr.bf16.mxu0 0
    %1567 = vmatpush1.bf16.msra.mxu0 0
    %1568 = vmatprep.subr.bf16.mxu0 0
    %1569 = vmatpush1.bf16.msra.mxu0 0
    %1570 = vmatprep.mubr.bf16.mxu0 0
    %1571 = vmatmul.mubr.bf16.gmra.mrb[0].mxu0 %v1536
    %v1572 = vpop.f32.mrb[0].mxu0
    %v1573 = vadd.f32 0.0, %v1572
    %v1574 = vpop.f32.mrb[0].mxu0
    %v1575 = vadd.f32 0.0, %v1574
    %v1576 = vpop.f32.mrb[0].mxu0
    %v1577 = vpop.f32.mrb[0].mxu0
    %1578 = vdwg.mxu0
    %v1581 = vrot.slane %v1573, 2
    %v1582 = vrot.slane %v1575, 2
    %v1585 = vadd.f32 %v1529, %v1581
    %v1586 = vadd.f32 %v1530, %v1582
    %v1587 = vxor.u32 %v1585, 2147483648
    %v1588 = vxor.u32 %v1586, 2147483648
    %v1589 = vmul.f32 %v1587, 1.442695
    %v1590 = vpow.pop %v1589
    %v1591 = vmul.f32 %v1588, 1.442695
    %v1592 = vpow.pop %v1591
    %v1593 = vadd.f32 %v1590, 1.0
    %v1594 = vadd.f32 %v1592, 1.0
    %v1595 = vrcp.pop %v1593
    %v1596 = vmul.f32 1.0, %v1595
    %v1597 = vrcp.pop %v1594
    %v1598 = vmul.f32 1.0, %v1597
    %v1599 = vmul.f32 %v1596, %v339
    %v1600 = vmul.f32 %v1598, %v343
    %v1601 = vadd.f32 %v1599, %v352
    %v1602 = vadd.f32 %v1600, %v356
    %v1604 = vrot.slane %v1525, 6
    %v1606 = vmul.f32 %v1601, %v1604
    %v1607 = vmul.f32 %v1601, %v1602
    %1609 = vrot.lane.b32.xlu0 %v1607, 64
    %v1610 = vpop.permute.xlu0 %1609
    %v1612 = vadd.f32 %v1606, %v1610
    %v1613 = vtanh.pop %v1612
    %v1614 = vmul.f32 %v1602, %v1613
    %v1615 = vpack.c.bf16 %v1614, %v1614
    %v1616 = vld [vmem:[#allocation2 + $0x10] sm:$0x3]
    %v1617 = vld [vmem:[#allocation2 + $0x18] sm:$0x3]
    %v1619 = vrot.slane %v1615, 3
    %1620 = vrot.lane.b32.xlu0 %v1619, 64
    %v1621 = vpop.permute.xlu0 %1620
    %v1623 = vsel %vm176, %v1621, 0
    %1625 = vmatprep.subr.bf16.mxu0 %v1272
    %1626 = vmatpush1.bf16.msra.mxu0 %v1271
    %1627 = vmatprep.subr.bf16.mxu0 %v1274
    %1628 = vmatpush1.bf16.msra.mxu0 %v1273
    %1629 = vmatprep.subr.bf16.mxu0 %v1276
    %1630 = vmatpush1.bf16.msra.mxu0 %v1275
    %1631 = vmatprep.subr.bf16.mxu0 %v1278
    %1632 = vmatpush1.bf16.msra.mxu0 %v1277
    %1633 = vmatprep.subr.bf16.mxu0 0
    %1634 = vmatpush1.bf16.msra.mxu0 0
    %1635 = vmatprep.subr.bf16.mxu0 0
    %1636 = vmatpush1.bf16.msra.mxu0 0
    %1637 = vmatprep.subr.bf16.mxu0 0
    %1638 = vmatpush1.bf16.msra.mxu0 0
    %1639 = vmatprep.subr.bf16.mxu0 0
    %1640 = vmatpush1.bf16.msra.mxu0 0
    %1641 = vmatprep.subr.bf16.mxu0 0
    %1642 = vmatpush1.bf16.msra.mxu0 0
    %1643 = vmatprep.subr.bf16.mxu0 0
    %1644 = vmatpush1.bf16.msra.mxu0 0
    %1645 = vmatprep.subr.bf16.mxu0 0
    %1646 = vmatpush1.bf16.msra.mxu0 0
    %1647 = vmatprep.subr.bf16.mxu0 0
    %1648 = vmatpush1.bf16.msra.mxu0 0
    %1649 = vmatprep.subr.bf16.mxu0 0
    %1650 = vmatpush1.bf16.msra.mxu0 0
    %1651 = vmatprep.subr.bf16.mxu0 0
    %1652 = vmatpush1.bf16.msra.mxu0 0
    %1653 = vmatprep.subr.bf16.mxu0 0
    %1654 = vmatpush1.bf16.msra.mxu0 0
    %1655 = vmatprep.subr.bf16.mxu0 0
    %1656 = vmatpush1.bf16.msra.mxu0 0
    %1657 = vmatprep.mubr.bf16.mxu0 0
    %1658 = vmatmul.mubr.bf16.gmra.mrb[0].mxu0 %v1623
    %v1659 = vpop.f32.mrb[0].mxu0
    %v1660 = vadd.f32 0.0, %v1659
    %v1661 = vpop.f32.mrb[0].mxu0
    %v1662 = vadd.f32 0.0, %v1661
    %v1663 = vpop.f32.mrb[0].mxu0
    %v1664 = vpop.f32.mrb[0].mxu0
    %1665 = vdwg.mxu0
    %v1666 = vadd.f32 %v1616, %v1660
    %v1667 = vadd.f32 %v1617, %v1662
    %v1668 = vxor.u32 %v1666, 2147483648
    %v1669 = vxor.u32 %v1667, 2147483648
    %v1670 = vmul.f32 %v1668, 1.442695
    %v1671 = vpow.pop %v1670
    %v1672 = vmul.f32 %v1669, 1.442695
    %v1673 = vpow.pop %v1672
    %v1674 = vadd.f32 %v1671, 1.0
    %v1675 = vadd.f32 %v1673, 1.0
    %v1676 = vrcp.pop %v1674
    %v1677 = vmul.f32 1.0, %v1676
    %v1678 = vrcp.pop %v1675
    %v1679 = vmul.f32 1.0, %v1678
    %v1680 = vmul.f32 %v1677, %v339
    %v1681 = vmul.f32 %v1679, %v343
    %v1682 = vadd.f32 %v1680, %v352
    %v1683 = vadd.f32 %v1681, %v356
    %v1685 = vrot.slane %v1612, 6
    %v1687 = vmul.f32 %v1682, %v1685
    %v1688 = vmul.f32 %v1682, %v1683
    %1690 = vrot.lane.b32.xlu0 %v1688, 64
    %v1691 = vpop.permute.xlu0 %1690
    %v1693 = vadd.f32 %v1687, %v1691
    %v1694 = vtanh.pop %v1693
    %v1695 = vmul.f32 %v1683, %v1694
    %v1696 = vpack.c.bf16 %v1695, %v1695
    %v1697 = vld [vmem:[#allocation2 + $0x10] sm:$0xc]
    %v1698 = vld [vmem:[#allocation2 + $0x18] sm:$0xc]
    %1700 = vrot.lane.b32.xlu0 %v1696, 64
    %v1701 = vpop.permute.xlu0 %1700
    %v1703 = vsel %vm176, %v1701, 0
    %1705 = vmatprep.subr.bf16.mxu0 %v1272
    %1706 = vmatpush1.bf16.msra.mxu0 %v1271
    %1707 = vmatprep.subr.bf16.mxu0 %v1274
    %1708 = vmatpush1.bf16.msra.mxu0 %v1273
    %1709 = vmatprep.subr.bf16.mxu0 %v1276
    %1710 = vmatpush1.bf16.msra.mxu0 %v1275
    %1711 = vmatprep.subr.bf16.mxu0 %v1278
    %1712 = vmatpush1.bf16.msra.mxu0 %v1277
    %1713 = vmatprep.subr.bf16.mxu0 0
    %1714 = vmatpush1.bf16.msra.mxu0 0
    %1715 = vmatprep.subr.bf16.mxu0 0
    %1716 = vmatpush1.bf16.msra.mxu0 0
    %1717 = vmatprep.subr.bf16.mxu0 0
    %1718 = vmatpush1.bf16.msra.mxu0 0
    %1719 = vmatprep.subr.bf16.mxu0 0
    %1720 = vmatpush1.bf16.msra.mxu0 0
    %1721 = vmatprep.subr.bf16.mxu0 0
    %1722 = vmatpush1.bf16.msra.mxu0 0
    %1723 = vmatprep.subr.bf16.mxu0 0
    %1724 = vmatpush1.bf16.msra.mxu0 0
    %1725 = vmatprep.subr.bf16.mxu0 0
    %1726 = vmatpush1.bf16.msra.mxu0 0
    %1727 = vmatprep.subr.bf16.mxu0 0
    %1728 = vmatpush1.bf16.msra.mxu0 0
    %1729 = vmatprep.subr.bf16.mxu0 0
    %1730 = vmatpush1.bf16.msra.mxu0 0
    %1731 = vmatprep.subr.bf16.mxu0 0
    %1732 = vmatpush1.bf16.msra.mxu0 0
    %1733 = vmatprep.subr.bf16.mxu0 0
    %1734 = vmatpush1.bf16.msra.mxu0 0
    %1735 = vmatprep.subr.bf16.mxu0 0
    %1736 = vmatpush1.bf16.msra.mxu0 0
    %1737 = vmatprep.mubr.bf16.mxu0 0
    %1738 = vmatmul.mubr.bf16.gmra.mrb[0].mxu0 %v1703
    %v1739 = vpop.f32.mrb[0].mxu0
    %v1740 = vadd.f32 0.0, %v1739
    %v1741 = vpop.f32.mrb[0].mxu0
    %v1742 = vadd.f32 0.0, %v1741
    %v1743 = vpop.f32.mrb[0].mxu0
    %v1744 = vpop.f32.mrb[0].mxu0
    %1745 = vdwg.mxu0
    %v1748 = vrot.slane %v1740, 6
    %v1749 = vrot.slane %v1742, 6
    %v1752 = vadd.f32 %v1697, %v1748
    %v1753 = vadd.f32 %v1698, %v1749
    %v1754 = vxor.u32 %v1752, 2147483648
    %v1755 = vxor.u32 %v1753, 2147483648
    %v1756 = vmul.f32 %v1754, 1.442695
    %v1757 = vpow.pop %v1756
    %v1758 = vmul.f32 %v1755, 1.442695
    %v1759 = vpow.pop %v1758
    %v1760 = vadd.f32 %v1757, 1.0
    %v1761 = vadd.f32 %v1759, 1.0
    %v1762 = vrcp.pop %v1760
    %v1763 = vmul.f32 1.0, %v1762
    %v1764 = vrcp.pop %v1761
    %v1765 = vmul.f32 1.0, %v1764
    %v1766 = vmul.f32 %v1763, %v339
    %v1767 = vmul.f32 %v1765, %v343
    %v1768 = vadd.f32 %v1766, %v352
    %v1769 = vadd.f32 %v1767, %v356
    %v1771 = vrot.slane %v1693, 6
    %v1773 = vmul.f32 %v1768, %v1771
    %v1774 = vmul.f32 %v1768, %v1769
    %1776 = vrot.lane.b32.xlu0 %v1774, 64
    %v1777 = vpop.permute.xlu0 %1776
    %v1779 = vadd.f32 %v1773, %v1777
    %v1780 = vtanh.pop %v1779
    %v1781 = vmul.f32 %v1769, %v1780
    %v1782 = vpack.c.bf16 %v1781, %v1781
    %v1783 = vld [vmem:[#allocation2 + $0x10] sm:$0x30]
    %v1784 = vld [vmem:[#allocation2 + $0x18] sm:$0x30]
    %v1786 = vrot.slane %v1782, 1
    %1787 = vrot.lane.b32.xlu0 %v1786, 64
    %v1788 = vpop.permute.xlu0 %1787
    %v1790 = vsel %vm176, %v1788, 0
    %1792 = vmatprep.subr.bf16.mxu0 %v1272
    %1793 = vmatpush1.bf16.msra.mxu0 %v1271
    %1794 = vmatprep.subr.bf16.mxu0 %v1274
    %1795 = vmatpush1.bf16.msra.mxu0 %v1273
    %1796 = vmatprep.subr.bf16.mxu0 %v1276
    %1797 = vmatpush1.bf16.msra.mxu0 %v1275
    %1798 = vmatprep.subr.bf16.mxu0 %v1278
    %1799 = vmatpush1.bf16.msra.mxu0 %v1277
    %1800 = vmatprep.subr.bf16.mxu0 0
    %1801 = vmatpush1.bf16.msra.mxu0 0
    %1802 = vmatprep.subr.bf16.mxu0 0
    %1803 = vmatpush1.bf16.msra.mxu0 0
    %1804 = vmatprep.subr.bf16.mxu0 0
    %1805 = vmatpush1.bf16.msra.mxu0 0
    %1806 = vmatprep.subr.bf16.mxu0 0
    %1807 = vmatpush1.bf16.msra.mxu0 0
    %1808 = vmatprep.subr.bf16.mxu0 0
    %1809 = vmatpush1.bf16.msra.mxu0 0
    %1810 = vmatprep.subr.bf16.mxu0 0
    %1811 = vmatpush1.bf16.msra.mxu0 0
    %1812 = vmatprep.subr.bf16.mxu0 0
    %1813 = vmatpush1.bf16.msra.mxu0 0
    %1814 = vmatprep.subr.bf16.mxu0 0
    %1815 = vmatpush1.bf16.msra.mxu0 0
    %1816 = vmatprep.subr.bf16.mxu0 0
    %1817 = vmatpush1.bf16.msra.mxu0 0
    %1818 = vmatprep.subr.bf16.mxu0 0
    %1819 = vmatpush1.bf16.msra.mxu0 0
    %1820 = vmatprep.subr.bf16.mxu0 0
    %1821 = vmatpush1.bf16.msra.mxu0 0
    %1822 = vmatprep.subr.bf16.mxu0 0
    %1823 = vmatpush1.bf16.msra.mxu0 0
    %1824 = vmatprep.mubr.bf16.mxu0 0
    %1825 = vmatmul.mubr.bf16.gmra.mrb[0].mxu0 %v1790
    %v1826 = vpop.f32.mrb[0].mxu0
    %v1827 = vadd.f32 0.0, %v1826
    %v1828 = vpop.f32.mrb[0].mxu0
    %v1829 = vadd.f32 0.0, %v1828
    %v1830 = vpop.f32.mrb[0].mxu0
    %v1831 = vpop.f32.mrb[0].mxu0
    %1832 = vdwg.mxu0
    %v1835 = vrot.slane %v1827, 4
    %v1836 = vrot.slane %v1829, 4
    %v1839 = vadd.f32 %v1783, %v1835
    %v1840 = vadd.f32 %v1784, %v1836
    %v1841 = vxor.u32 %v1839, 2147483648
    %v1842 = vxor.u32 %v1840, 2147483648
    %v1843 = vmul.f32 %v1841, 1.442695
    %v1844 = vpow.pop %v1843
    %v1845 = vmul.f32 %v1842, 1.442695
    %v1846 = vpow.pop %v1845
    %v1847 = vadd.f32 %v1844, 1.0
    %v1848 = vadd.f32 %v1846, 1.0
    %v1849 = vrcp.pop %v1847
    %v1850 = vmul.f32 1.0, %v1849
    %v1851 = vrcp.pop %v1848
    %v1852 = vmul.f32 1.0, %v1851
    %v1853 = vmul.f32 %v1850, %v339
    %v1854 = vmul.f32 %v1852, %v343
    %v1855 = vadd.f32 %v1853, %v352
    %v1856 = vadd.f32 %v1854, %v356
    %v1858 = vrot.slane %v1779, 6
    %v1860 = vmul.f32 %v1855, %v1858
    %v1861 = vmul.f32 %v1855, %v1856
    %1863 = vrot.lane.b32.xlu0 %v1861, 64
    %v1864 = vpop.permute.xlu0 %1863
    %v1866 = vadd.f32 %v1860, %v1864
    %v1867 = vtanh.pop %v1866
    %v1868 = vmul.f32 %v1856, %v1867
    %v1869 = vpack.c.bf16 %v1868, %v1868
    %v1870 = vld [vmem:[#allocation2 + $0x10] sm:$0xc0]
    %v1871 = vld [vmem:[#allocation2 + $0x18] sm:$0xc0]
    %v1873 = vrot.slane %v1869, 2
    %1874 = vrot.lane.b32.xlu0 %v1873, 64
    %v1875 = vpop.permute.xlu0 %1874
    %v1877 = vsel %vm176, %v1875, 0
    %1879 = vmatprep.subr.bf16.mxu0 %v1272
    %1880 = vmatpush1.bf16.msra.mxu0 %v1271
    %1881 = vmatprep.subr.bf16.mxu0 %v1274
    %1882 = vmatpush1.bf16.msra.mxu0 %v1273
    %1883 = vmatprep.subr.bf16.mxu0 %v1276
    %1884 = vmatpush1.bf16.msra.mxu0 %v1275
    %1885 = vmatprep.subr.bf16.mxu0 %v1278
    %1886 = vmatpush1.bf16.msra.mxu0 %v1277
    %1887 = vmatprep.subr.bf16.mxu0 0
    %1888 = vmatpush1.bf16.msra.mxu0 0
    %1889 = vmatprep.subr.bf16.mxu0 0
    %1890 = vmatpush1.bf16.msra.mxu0 0
    %1891 = vmatprep.subr.bf16.mxu0 0
    %1892 = vmatpush1.bf16.msra.mxu0 0
    %1893 = vmatprep.subr.bf16.mxu0 0
    %1894 = vmatpush1.bf16.msra.mxu0 0
    %1895 = vmatprep.subr.bf16.mxu0 0
    %1896 = vmatpush1.bf16.msra.mxu0 0
    %1897 = vmatprep.subr.bf16.mxu0 0
    %1898 = vmatpush1.bf16.msra.mxu0 0
    %1899 = vmatprep.subr.bf16.mxu0 0
    %1900 = vmatpush1.bf16.msra.mxu0 0
    %1901 = vmatprep.subr.bf16.mxu0 0
    %1902 = vmatpush1.bf16.msra.mxu0 0
    %1903 = vmatprep.subr.bf16.mxu0 0
    %1904 = vmatpush1.bf16.msra.mxu0 0
    %1905 = vmatprep.subr.bf16.mxu0 0
    %1906 = vmatpush1.bf16.msra.mxu0 0
    %1907 = vmatprep.subr.bf16.mxu0 0
    %1908 = vmatpush1.bf16.msra.mxu0 0
    %1909 = vmatprep.subr.bf16.mxu0 0
    %1910 = vmatpush1.bf16.msra.mxu0 0
    %1911 = vmatprep.mubr.bf16.mxu0 0
    %1912 = vmatmul.mubr.bf16.gmra.mrb[0].mxu0 %v1877
    %v1913 = vpop.f32.mrb[0].mxu0
    %v1914 = vadd.f32 0.0, %v1913
    %v1915 = vpop.f32.mrb[0].mxu0
    %v1916 = vadd.f32 0.0, %v1915
    %v1917 = vpop.f32.mrb[0].mxu0
    %v1918 = vpop.f32.mrb[0].mxu0
    %1919 = vdwg.mxu0
    %v1922 = vrot.slane %v1914, 2
    %v1923 = vrot.slane %v1916, 2
    %v1926 = vadd.f32 %v1870, %v1922
    %v1927 = vadd.f32 %v1871, %v1923
    %v1928 = vxor.u32 %v1926, 2147483648
    %v1929 = vxor.u32 %v1927, 2147483648
    %v1930 = vmul.f32 %v1928, 1.442695
    %v1931 = vpow.pop %v1930
    %v1932 = vmul.f32 %v1929, 1.442695
    %v1933 = vpow.pop %v1932
    %v1934 = vadd.f32 %v1931, 1.0
    %v1935 = vadd.f32 %v1933, 1.0
    %v1936 = vrcp.pop %v1934
    %v1937 = vmul.f32 1.0, %v1936
    %v1938 = vrcp.pop %v1935
    %v1939 = vmul.f32 1.0, %v1938
    %v1940 = vmul.f32 %v1937, %v339
    %v1941 = vmul.f32 %v1939, %v343
    %v1942 = vadd.f32 %v1940, %v352
    %v1943 = vadd.f32 %v1941, %v356
    %v1945 = vrot.slane %v1866, 6
    %v1947 = vmul.f32 %v1942, %v1945
    %v1948 = vmul.f32 %v1942, %v1943
    %1950 = vrot.lane.b32.xlu0 %v1948, 64
    %v1951 = vpop.permute.xlu0 %1950
    %v1953 = vadd.f32 %v1947, %v1951
    %v1954 = vtanh.pop %v1953
    %v1955 = vmul.f32 %v1943, %v1954
    %v1956 = vpack.c.bf16 %v1955, %v1955
    %v1957 = vld [vmem:[%s8] sm:$0xf]
    %v1958 = vld [vmem:[%s8 + $0x4] sm:$0xf]
    %v1959 = vld [vmem:[%s8 + $0x8] sm:$0xf]
    %v1960 = vld [vmem:[%s8 + $0xc] sm:$0xf]
    %v1961 = vld [vmem:[%s8 + $0x10] sm:$0xf]
    %v1962 = vld [vmem:[%s8 + $0x14] sm:$0xf]
    %v1963 = vld [vmem:[%s8 + $0x18] sm:$0xf]
    %v1964 = vld [vmem:[%s8 + $0x1c] sm:$0xf]
    %v1965 = vld [vmem:[%s9] sm:$0xf]
    %v1966 = vld [vmem:[%s9 + $0x4] sm:$0xf]
    %v1967 = vld [vmem:[%s9 + $0x8] sm:$0xf]
    %v1968 = vld [vmem:[%s9 + $0xc] sm:$0xf]
    %v1969 = vld [vmem:[%s9 + $0x10] sm:$0xf]
    %v1970 = vld [vmem:[%s9 + $0x14] sm:$0xf]
    %v1971 = vld [vmem:[%s9 + $0x18] sm:$0xf]
    %v1972 = vld [vmem:[%s9 + $0x1c] sm:$0xf]
    %v1981 = vunpack.c.l.b16 %v1965
    %v1982 = vunpack.c.l.b16 %v1966
    %v1983 = vunpack.c.l.b16 %v1967
    %v1984 = vunpack.c.l.b16 %v1968
    %v1985 = vunpack.c.l.b16 %v1969
    %v1986 = vunpack.c.l.b16 %v1970
    %v1987 = vunpack.c.l.b16 %v1971
    %v1988 = vunpack.c.l.b16 %v1972
    %v1989 = vpack.c.b16 %v1982, %v1981
    %v1990 = vpack.c.b16 %v1984, %v1983
    %v1991 = vpack.c.b16 %v1986, %v1985
    %v1992 = vpack.c.b16 %v1988, %v1987
    %1997 = vmatprep.subr.bf16.mxu0 0
    %1998 = vmatpush1.bf16.msra.mxu0 %v1989
    %1999 = vmatprep.subr.bf16.mxu0 0
    %2000 = vmatpush1.bf16.msra.mxu0 %v1990
    %2001 = vmatprep.subr.bf16.mxu0 0
    %2002 = vmatpush1.bf16.msra.mxu0 %v1991
    %2003 = vmatprep.subr.bf16.mxu0 0
    %2004 = vmatpush1.bf16.msra.mxu0 %v1992
    %2005 = vmatprep.subr.bf16.mxu0 0
    %2006 = vmatpush1.bf16.msra.mxu0 0
    %2007 = vmatprep.subr.bf16.mxu0 0
    %2008 = vmatpush1.bf16.msra.mxu0 0
    %2009 = vmatprep.subr.bf16.mxu0 0
    %2010 = vmatpush1.bf16.msra.mxu0 0
    %2011 = vmatprep.subr.bf16.mxu0 0
    %2012 = vmatpush1.bf16.msra.mxu0 0
    %2013 = vmatprep.subr.bf16.mxu0 0
    %2014 = vmatpush1.bf16.msra.mxu0 0
    %2015 = vmatprep.subr.bf16.mxu0 0
    %2016 = vmatpush1.bf16.msra.mxu0 0
    %2017 = vmatprep.subr.bf16.mxu0 0
    %2018 = vmatpush1.bf16.msra.mxu0 0
    %2019 = vmatprep.subr.bf16.mxu0 0
    %2020 = vmatpush1.bf16.msra.mxu0 0
    %2021 = vmatprep.subr.bf16.mxu0 0
    %2022 = vmatpush1.bf16.msra.mxu0 0
    %2023 = vmatprep.subr.bf16.mxu0 0
    %2024 = vmatpush1.bf16.msra.mxu0 0
    %2025 = vmatprep.subr.bf16.mxu0 0
    %2026 = vmatpush1.bf16.msra.mxu0 0
    %2027 = vmatprep.subr.bf16.mxu0 0
    %2028 = vmatpush1.bf16.msra.mxu0 0
    %2029 = vmatprep.mubr.bf16.mxu0 0
    %2030 = vmatmul.mubr.bf16.gmra.mrb[0].mxu0 %v1362
    %v2031 = vpop.f32.mrb[0].mxu0
    %v2032 = vadd.f32 0.0, %v2031
    %v2033 = vpop.f32.mrb[0].mxu0
    %v2034 = vpop.f32.mrb[0].mxu0
    %v2035 = vpop.f32.mrb[0].mxu0
    %2036 = vdwg.mxu0
    %v2038 = vrot.slane %v1956, 3
    %2039 = vrot.lane.b32.xlu0 %v2038, 64
    %v2040 = vpop.permute.xlu0 %2039
    %v2049 = vunpack.c.l.b16 %v1957
    %v2050 = vunpack.c.l.b16 %v1958
    %v2051 = vunpack.c.l.b16 %v1959
    %v2052 = vunpack.c.l.b16 %v1960
    %v2053 = vunpack.c.l.b16 %v1961
    %v2054 = vunpack.c.l.b16 %v1962
    %v2055 = vunpack.c.l.b16 %v1963
    %v2056 = vunpack.c.l.b16 %v1964
    %v2057 = vpack.c.b16 %v2050, %v2049
    %v2058 = vpack.c.b16 %v2052, %v2051
    %v2059 = vpack.c.b16 %v2054, %v2053
    %v2060 = vpack.c.b16 %v2056, %v2055
    %v2066 = vsel %vm176, %v2040, 0
    %2068 = vmatprep.subr.bf16.mxu0 0
    %2069 = vmatpush1.bf16.msra.mxu0 %v2057
    %2070 = vmatprep.subr.bf16.mxu0 0
    %2071 = vmatpush1.bf16.msra.mxu0 %v2058
    %2072 = vmatprep.subr.bf16.mxu0 0
    %2073 = vmatpush1.bf16.msra.mxu0 %v2059
    %2074 = vmatprep.subr.bf16.mxu0 0
    %2075 = vmatpush1.bf16.msra.mxu0 %v2060
    %2076 = vmatprep.subr.bf16.mxu0 0
    %2077 = vmatpush1.bf16.msra.mxu0 0
    %2078 = vmatprep.subr.bf16.mxu0 0
    %2079 = vmatpush1.bf16.msra.mxu0 0
    %2080 = vmatprep.subr.bf16.mxu0 0
    %2081 = vmatpush1.bf16.msra.mxu0 0
    %2082 = vmatprep.subr.bf16.mxu0 0
    %2083 = vmatpush1.bf16.msra.mxu0 0
    %2084 = vmatprep.subr.bf16.mxu0 0
    %2085 = vmatpush1.bf16.msra.mxu0 0
    %2086 = vmatprep.subr.bf16.mxu0 0
    %2087 = vmatpush1.bf16.msra.mxu0 0
    %2088 = vmatprep.subr.bf16.mxu0 0
    %2089 = vmatpush1.bf16.msra.mxu0 0
    %2090 = vmatprep.subr.bf16.mxu0 0
    %2091 = vmatpush1.bf16.msra.mxu0 0
    %2092 = vmatprep.subr.bf16.mxu0 0
    %2093 = vmatpush1.bf16.msra.mxu0 0
    %2094 = vmatprep.subr.bf16.mxu0 0
    %2095 = vmatpush1.bf16.msra.mxu0 0
    %2096 = vmatprep.subr.bf16.mxu0 0
    %2097 = vmatpush1.bf16.msra.mxu0 0
    %2098 = vmatprep.subr.bf16.mxu0 0
    %2099 = vmatpush1.bf16.msra.mxu0 0
    %2100 = vmatprep.mubr.bf16.mxu0 0
    %2101 = vmatmul.mubr.bf16.gmra.mrb[0].mxu0 %v2066
    %v2102 = vpop.f32.mrb[0].mxu0
    %v2103 = vadd.f32 %v2032, %v2102
    %v2104 = vpop.f32.mrb[0].mxu0
    %v2105 = vpop.f32.mrb[0].mxu0
    %v2106 = vpop.f32.mrb[0].mxu0
    %2107 = vdwg.mxu0
    %v2108 = vld [vmem:[%s10] sm:$0x1]
    %v2110 = vlaneseq
    %v2111 = vshrl.u32 %v2110, 7
    %v2112 = vsub.s32 0, %v2111
    %v2113 = vrot.slane %v2108, %v2112
    %v2115 = vadd.f32 %v2103, %v2113
    %v2116 = vxor.u32 %v2115, 2147483648
    %v2117 = vmul.f32 %v2116, 1.442695
    %v2118 = vpow.pop %v2117
    %v2119 = vadd.f32 %v2118, 1.0
    %v2120 = vrcp.pop %v2119
    %v2121 = vmul.f32 1.0, %v2120
    %v2122 = vmul.f32 %v2115, %v2121
    %v2123 = vld [vmem:[%s13] sm:$0x1]
    %v2125 = vlaneseq
    %v2126 = vshrl.u32 %v2125, 7
    %v2127 = vsub.s32 0, %v2126
    %v2128 = vrot.slane %v2123, %v2127
    %v2130 = vmul.f32 %v2122, %v2128
    %v2131 = vld [vmem:[%s14] sm:$0x1]
    %v2133 = vlaneseq
    %v2134 = vshrl.u32 %v2133, 7
    %v2135 = vsub.s32 0, %v2134
    %v2136 = vrot.slane %v2131, %v2135
    %v2138 = vadd.f32 %v2130, %v2136
    %vm2139 = vcmask 254976
    %2140 = vst.msk [vmem:[#allocation13] sm:$0x3] %vm2139, %v2138
    // Predicated region
    $region78: #{tpu_custom_call.1} parent=1 // pred_check
      _
    $region79: #{tpu_custom_call.1} parent=1 // pred_check_branch
      %2142 = sbr.rel (0) target = $region81
    $region80: #{tpu_custom_call.1} parent=1 // pred_region
      %s2144 = ssub.s32 32, 32
      %2145 = vsyncadd [#allocation7], %s2144
      %s2147 = sshll.u32 [#allocation13], 4
      %s2148 = int_to_ptr.vmem [resolvable:$true] %s2147
      %2150 = dma.vmem_to_hbm [thread:$0]  %s2148, 32, %s15, [#allocation7]
    $region81: #{tpu_custom_call.1} parent=1 // pred_fallthru
      _
    // Predicated region
    $region82: #{tpu_custom_call.1} parent=1 // pred_check
      _
    $region83: #{tpu_custom_call.1} parent=1 // pred_check_branch
      %2152 = sbr.rel (0) target = $region85
    $region84: #{tpu_custom_call.1} parent=1 // pred_region
      %2153 = dma.done [#allocation7], 32
    $region85: #{tpu_custom_call.1} parent=1 // pred_fallthru
      _
    %2154 = vsyncpa [#allocation6], 1
    %2155 = vsyncpa [#allocation9], 1
    %2156 = vsyncpa [#allocation12], 1
    %2157 = vsyncpa [#allocation7], 1

</llo_original>
